<compile_context>
chip_gen: v7x
topology: tpu7x:2x2x1
jax: 0.10.0
libtpu: 0.0.40
codegen_flags: <defaults>
</compile_context>

<pallas_src>
import functools

import jax
import jax.numpy as jnp
from jax.experimental import pallas as pl
from jax.experimental.pallas import tpu as pltpu

HIDDEN = (16, 32)   # DQN.hidden_dim
GROUP = 32          # batch rows packed per lane-dense group (32*in=256, 32*out=128)


def _cdiv(a, b):
    return -(-a // b)


def _round_up(x, m):
    return _cdiv(x, m) * m


def _dqn_kernel(xp_ref, w1_ref, b1_ref, w2_ref, b2_ref, w3_ref, b3_ref, op_ref):
    """Fused fc1 -> relu -> fc2 -> relu -> fc3 on one packed batch tile.

    All arrays are row-packed / block-diagonal, so every matmul is lane-dense
    (K, N in {256, 512, 1024, G*out}). MXU accumulates in f32; bias-add + ReLU
    stay f32 on the VPU.
    """
    cdt = w1_ref.dtype                       # compute dtype (f32 or bf16)
    xp = xp_ref[...].astype(cdt)             # cast in-kernel (x stays f32 in HBM)

    h1 = jnp.dot(xp, w1_ref[...], preferred_element_type=jnp.float32) + b1_ref[...]
    h1 = jnp.maximum(h1, 0.0)

    h2 = jnp.dot(h1.astype(cdt), w2_ref[...],
                 preferred_element_type=jnp.float32) + b2_ref[...]
    h2 = jnp.maximum(h2, 0.0)

    y = jnp.dot(h2.astype(cdt), w3_ref[...],
                preferred_element_type=jnp.float32) + b3_ref[...]
    op_ref[...] = y.astype(op_ref.dtype)


@functools.partial(jax.jit, static_argnames=("tb", "compute_dtype"))
def dqn_forward(x, params, *, tb=8192, compute_dtype=jnp.float32):
    """x: [B, in_dim] float32. params: dict of w1,b1,w2,b2,w3,b3 (w: [in, out])."""
    w1, b1 = params["w1"], params["b1"]
    w2, b2 = params["w2"], params["b2"]
    w3, b3 = params["w3"], params["b3"]

    B, in_dim = x.shape
    h1_dim, h2_dim = HIDDEN
    out_dim = w3.shape[1]
    G = GROUP
    cdt = jnp.dtype(compute_dtype)

    # ---- block-diagonal weight / tiled bias packing (tiny arrays, ~3 MiB) ----
    eye = jnp.eye(G, dtype=cdt)
    w1p = jnp.kron(eye, w1.astype(cdt))          # (G*in_dim, G*16)
    w2p = jnp.kron(eye, w2.astype(cdt))          # (G*16,     G*32)
    w3p = jnp.kron(eye, w3.astype(cdt))          # (G*32,     G*out_dim)
    b1p = jnp.tile(b1, (1, G))                   # (1, G*16)  f32
    b2p = jnp.tile(b2, (1, G))                   # (1, G*32)  f32
    b3p = jnp.tile(b3, (1, G))                   # (1, G*out_dim) f32

    # ---- batch tiling: TB multiple of 8*G so packed tiles are (8k, 128m) ----
    row_quantum = 8 * G                          # 256 rows -> 8 packed sublanes
    B32 = _round_up(B, row_quantum)
    n_steps = _cdiv(B32, max(tb, row_quantum))
    if n_steps == 1 and B32 >= 4096:
        n_steps = 2                              # v7x megacore: feed both TCs
    TB = _round_up(_cdiv(B32, n_steps), row_quantum)
    Bp = n_steps * TB
    if Bp != B:
        # At most row_quantum-1 = 255 padded rows; padded rows are sliced off
        # below and nothing reduces across the batch inside the kernel.
        x = jnp.pad(x, ((0, Bp - B), (0, 0)))

    xp = x.reshape(Bp // G, G * in_dim)          # lane-dense packed input (view)
    TR = TB // G                                 # packed rows per grid step

    # ---- advisory cost estimate (actual block-diagonal MXU work) ----
    dsize = cdt.itemsize
    flops = 2 * Bp * G * (in_dim * h1_dim + h1_dim * h2_dim + h2_dim * out_dim)
    bytes_accessed = (
        Bp * in_dim * 4                          # stream packed x (f32)
        + Bp * out_dim * 4                       # stream packed y (f32)
        + (w1p.size + w2p.size + w3p.size) * dsize
        + (b1p.size + b2p.size + b3p.size) * 4
    )

    # Weights/biases: full-array blocks with constant index_map -> VMEM-resident
    # for the whole grid (no re-DMA per batch tile).
    resident = lambda a: pl.BlockSpec(a.shape, lambda i, _n=a.ndim: (0,) * _n)

    out_packed = pl.pallas_call(
        _dqn_kernel,
        out_shape=jax.ShapeDtypeStruct((Bp // G, G * out_dim), jnp.float32),
        grid=(n_steps,),
        in_specs=[
            pl.BlockSpec((TR, G * in_dim), lambda i: (i, 0)),   # streamed batch tile
            resident(w1p), resident(b1p),
            resident(w2p), resident(b2p),
            resident(w3p), resident(b3p),
        ],
        out_specs=pl.BlockSpec((TR, G * out_dim), lambda i: (i, 0)),
        compiler_params=pltpu.CompilerParams(
            dimension_semantics=("parallel",),   # megacore on v7x; no-op v5e/v6e
            vmem_limit_bytes=48 * 1024 * 1024,   # v7x-safe, ample for ~10 MiB use
        ),
        cost_estimate=pl.CostEstimate(
            flops=flops, transcendentals=0, bytes_accessed=bytes_accessed),
    )(xp, w1p, b1p, w2p, b2p, w3p, b3p)

    # Row-major unpack is a pure view; only batch-padding rows are dropped.
    return out_packed.reshape(Bp, out_dim)[:B]


def init_params(key, in_dim, out_dim):
    """PyTorch-Linear-style uniform +-1/sqrt(fan_in) init; w stored [in, out]."""
    ks = jax.random.split(key, 6)
    dims = [(in_dim, HIDDEN[0]), (HIDDEN[0], HIDDEN[1]), (HIDDEN[1], out_dim)]
    params = {}
    for i, (fan_in, fan_out) in enumerate(dims, start=1):
        bound = 1.0 / (fan_in ** 0.5)
        params[f"w{i}"] = jax.random.uniform(
            ks[2 * (i - 1)], (fan_in, fan_out), jnp.float32, -bound, bound)
        # biases kept 2D [1, fan_out] for TPU-friendly broadcasting
        params[f"b{i}"] = jax.random.uniform(
            ks[2 * (i - 1) + 1], (1, fan_out), jnp.float32, -bound, bound)
    return params


def dqn_reference(x, params):
    h1 = jnp.maximum(x @ params["w1"] + params["b1"], 0.0)
    h2 = jnp.maximum(h1 @ params["w2"] + params["b2"], 0.0)
    return h2 @ params["w3"] + params["b3"]


if __name__ == "__main__":
    key = jax.random.PRNGKey(0)
    kx, kp, kx2, kx3 = jax.random.split(key, 4)

    in_dim, out_dim = 8, 4
    params = init_params(kp, in_dim, out_dim)

    # Tiny batch: single grid step, batch padded to one 256-row packed tile.
    x_small = jax.random.normal(kx, (8, in_dim), jnp.float32)
    out_small = jax.block_until_ready(dqn_forward(x_small, params))
    ref_small = dqn_reference(x_small, params)
    assert out_small.shape == (8, out_dim)
    assert jnp.allclose(out_small, ref_small, atol=1e-5, rtol=1e-5)

    # Replay-buffer-sized batch (non-multiple of the tile) on a small tile so
    # the multi-step pipelined grid + batch padding path is exercised.
    x_big = jax.random.normal(kx2, (2072, in_dim), jnp.float32)
    out_big = jax.block_until_ready(dqn_forward(x_big, params, tb=512))
    ref_big = dqn_reference(x_big, params)
    assert out_big.shape == (2072, out_dim)
    assert jnp.allclose(out_big, ref_big, atol=1e-4, rtol=1e-4)

    # Default large-tile path, incl. the forced >=2-step split (v7x megacore).
    x_med = jax.random.normal(kx3, (4096, in_dim), jnp.float32)
    out_med = jax.block_until_ready(dqn_forward(x_med, params))
    assert out_med.shape == (4096, out_dim)
    assert jnp.allclose(out_med, dqn_reference(x_med, params), atol=1e-4, rtol=1e-4)

    # Optional bf16 MXU path (v6e/v7x): x stays f32 in HBM, cast in-kernel,
    # f32 accumulation. Loose tolerance; keep f32 for argmax-sensitive use.
    out_bf16 = jax.block_until_ready(
        dqn_forward(x_big, params, compute_dtype=jnp.bfloat16))
    assert out_bf16.shape == (2072, out_dim)
    assert jnp.allclose(out_bf16, ref_big, atol=1.5e-1, rtol=1e-1)

    print("KERNEL_OK")
</pallas_src>

<mosaic_0001>
module attributes {stable_mosaic.version = 11 : i64} {
  func.func @_dqn_kernel(%arg0: i32, %arg1: memref<8x256xf32, #tpu.memory_space<vmem>>, %arg2: memref<256x512xf32, #tpu.memory_space<vmem>>, %arg3: memref<1x512xf32, #tpu.memory_space<vmem>>, %arg4: memref<512x1024xf32, #tpu.memory_space<vmem>>, %arg5: memref<1x1024xf32, #tpu.memory_space<vmem>>, %arg6: memref<1024x128xf32, #tpu.memory_space<vmem>>, %arg7: memref<1x128xf32, #tpu.memory_space<vmem>>, %arg8: memref<8x128xf32, #tpu.memory_space<vmem>>) attributes {dimension_semantics = [#tpu.dimension_semantics<parallel>], iteration_bounds = array<i64: 1>, scalar_prefetch = 0 : i64, scratch_operands = 0 : i64, tpu.core_type = #tpu.core_type<tc>, window_params = [{transform_indices = @transform_0, window_bounds = array<i64: 8, 256>}, {pipeline_mode = #tpu.pipeline_mode<synchronous>, transform_indices = @transform_1, window_bounds = array<i64: 256, 512>}, {pipeline_mode = #tpu.pipeline_mode<synchronous>, transform_indices = @transform_2, window_bounds = array<i64: 1, 512>}, {pipeline_mode = #tpu.pipeline_mode<synchronous>, transform_indices = @transform_3, window_bounds = array<i64: 512, 1024>}, {pipeline_mode = #tpu.pipeline_mode<synchronous>, transform_indices = @transform_4, window_bounds = array<i64: 1, 1024>}, {pipeline_mode = #tpu.pipeline_mode<synchronous>, transform_indices = @transform_5, window_bounds = array<i64: 1024, 128>}, {pipeline_mode = #tpu.pipeline_mode<synchronous>, transform_indices = @transform_6, window_bounds = array<i64: 1, 128>}, {transform_indices = @transform_7, window_bounds = array<i64: 8, 128>}]} {
    %c0 = arith.constant 0 : index
    %c0_0 = arith.constant 0 : index
    %0 = vector.load %arg1[%c0, %c0_0] : memref<8x256xf32, #tpu.memory_space<vmem>>, vector<8x256xf32>
    %c0_1 = arith.constant 0 : index
    %c0_2 = arith.constant 0 : index
    %1 = vector.load %arg2[%c0_1, %c0_2] : memref<256x512xf32, #tpu.memory_space<vmem>>, vector<256x512xf32>
    %cst = arith.constant dense<0.000000e+00> : vector<8x512xf32>
    %2 = tpu.matmul %0, %1, %cst {dimension_numbers = #tpu.dot_dimension_numbers<[1], [0], [0], [1], [0, 0, 1, 1], [], []>} : vector<8x256xf32>, vector<256x512xf32>, vector<8x512xf32> -> vector<8x512xf32>
    %c0_3 = arith.constant 0 : index
    %c0_4 = arith.constant 0 : index
    %3 = vector.load %arg3[%c0_3, %c0_4] : memref<1x512xf32, #tpu.memory_space<vmem>>, vector<1x512xf32>
    %4 = vector.broadcast %3 : vector<1x512xf32> to vector<8x512xf32>
    %5 = arith.addf %2, %4 : vector<8x512xf32>
    %cst_5 = arith.constant 0.000000e+00 : f32
    %6 = vector.broadcast %cst_5 : f32 to vector<8x512xf32>
    %7 = arith.maximumf %5, %6 : vector<8x512xf32>
    %c0_6 = arith.constant 0 : index
    %c0_7 = arith.constant 0 : index
    %8 = vector.load %arg4[%c0_6, %c0_7] : memref<512x1024xf32, #tpu.memory_space<vmem>>, vector<512x1024xf32>
    %cst_8 = arith.constant dense<0.000000e+00> : vector<8x1024xf32>
    %9 = tpu.matmul %7, %8, %cst_8 {dimension_numbers = #tpu.dot_dimension_numbers<[1], [0], [0], [1], [0, 0, 1, 1], [], []>} : vector<8x512xf32>, vector<512x1024xf32>, vector<8x1024xf32> -> vector<8x1024xf32>
    %c0_9 = arith.constant 0 : index
    %c0_10 = arith.constant 0 : index
    %10 = vector.load %arg5[%c0_9, %c0_10] : memref<1x1024xf32, #tpu.memory_space<vmem>>, vector<1x1024xf32>
    %11 = vector.broadcast %10 : vector<1x1024xf32> to vector<8x1024xf32>
    %12 = arith.addf %9, %11 : vector<8x1024xf32>
    %cst_11 = arith.constant 0.000000e+00 : f32
    %13 = vector.broadcast %cst_11 : f32 to vector<8x1024xf32>
    %14 = arith.maximumf %12, %13 : vector<8x1024xf32>
    %c0_12 = arith.constant 0 : index
    %c0_13 = arith.constant 0 : index
    %15 = vector.load %arg6[%c0_12, %c0_13] : memref<1024x128xf32, #tpu.memory_space<vmem>>, vector<1024x128xf32>
    %cst_14 = arith.constant dense<0.000000e+00> : vector<8x128xf32>
    %16 = tpu.matmul %14, %15, %cst_14 {dimension_numbers = #tpu.dot_dimension_numbers<[1], [0], [0], [1], [0, 0, 1, 1], [], []>} : vector<8x1024xf32>, vector<1024x128xf32>, vector<8x128xf32> -> vector<8x128xf32>
    %c0_15 = arith.constant 0 : index
    %c0_16 = arith.constant 0 : index
    %17 = vector.load %arg7[%c0_15, %c0_16] : memref<1x128xf32, #tpu.memory_space<vmem>>, vector<1x128xf32>
    %18 = vector.broadcast %17 : vector<1x128xf32> to vector<8x128xf32>
    %19 = arith.addf %16, %18 : vector<8x128xf32>
    %c0_17 = arith.constant 0 : index
    %c0_18 = arith.constant 0 : index
    %20 = vector.load %arg8[%c0_17, %c0_18] : memref<8x128xf32, #tpu.memory_space<vmem>>, vector<8x128xf32>
    tpu.vector_store %arg8[%c0_17, %c0_18], %19 {strides = array<i32>} : memref<8x128xf32, #tpu.memory_space<vmem>>, vector<8x128xf32>,
    return
  }
  func.func @transform_0(%arg0: i32) -> (i32, i32) {
    %c0_i32 = arith.constant 0 : i32
    %c0_i32_0 = arith.constant 0 : i32
    return %arg0, %c0_i32 : i32, i32
  }
  func.func @transform_1(%arg0: i32) -> (i32, i32) {
    %c0_i32 = arith.constant 0 : i32
    %c0_i32_0 = arith.constant 0 : i32
    %c0_i32_1 = arith.constant 0 : i32
    return %c0_i32, %c0_i32_0 : i32, i32
  }
  func.func @transform_2(%arg0: i32) -> (i32, i32) {
    %c0_i32 = arith.constant 0 : i32
    %c0_i32_0 = arith.constant 0 : i32
    %c0_i32_1 = arith.constant 0 : i32
    return %c0_i32, %c0_i32_0 : i32, i32
  }
  func.func @transform_3(%arg0: i32) -> (i32, i32) {
    %c0_i32 = arith.constant 0 : i32
    %c0_i32_0 = arith.constant 0 : i32
    %c0_i32_1 = arith.constant 0 : i32
    return %c0_i32, %c0_i32_0 : i32, i32
  }
  func.func @transform_4(%arg0: i32) -> (i32, i32) {
    %c0_i32 = arith.constant 0 : i32
    %c0_i32_0 = arith.constant 0 : i32
    %c0_i32_1 = arith.constant 0 : i32
    return %c0_i32, %c0_i32_0 : i32, i32
  }
  func.func @transform_5(%arg0: i32) -> (i32, i32) {
    %c0_i32 = arith.constant 0 : i32
    %c0_i32_0 = arith.constant 0 : i32
    %c0_i32_1 = arith.constant 0 : i32
    return %c0_i32, %c0_i32_0 : i32, i32
  }
  func.func @transform_6(%arg0: i32) -> (i32, i32) {
    %c0_i32 = arith.constant 0 : i32
    %c0_i32_0 = arith.constant 0 : i32
    %c0_i32_1 = arith.constant 0 : i32
    return %c0_i32, %c0_i32_0 : i32, i32
  }
  func.func @transform_7(%arg0: i32) -> (i32, i32) {
    %c0_i32 = arith.constant 0 : i32
    %c0_i32_0 = arith.constant 0 : i32
    return %arg0, %c0_i32 : i32, i32
  }
}

</mosaic_0001>

<llo_original>
// kernel: dqn_forward.1
$region0: #{dqn_forward.1}
  #allocation0 [shape = 'u32[]', space=smem, size = 0x4, offset = 0x4, fixed_abs, tag = 'smem constant byte address 0x4 - core index']
  #allocation1 [shape = 'u32[144,128]{1,0:T(1,128)}', space=vmem, size = 0x12000, scoped, tag = 'internal scratch']
  %s0 = inlined_call_operand.vmem [shape: f32[8,256], index: 0, kind: input, shape index: {}]
  %s1 = inlined_call_operand.vmem [shape: f32[256,512], index: 1, kind: input, shape index: {}]
  %s2 = inlined_call_operand.vmem [shape: f32[1,512], index: 2, kind: input, shape index: {}]
  %s3 = inlined_call_operand.vmem [shape: f32[512,1024], index: 3, kind: input, shape index: {}]
  %s4 = inlined_call_operand.vmem [shape: f32[1,1024], index: 4, kind: input, shape index: {}]
  %s5 = inlined_call_operand.vmem [shape: f32[1024,128], index: 5, kind: input, shape index: {}]
  %s6 = inlined_call_operand.vmem [shape: f32[1,128], index: 6, kind: input, shape index: {}]
  %s7 = inlined_call_operand.vmem [shape: f32[8,128], index: 7, kind: output, shape index: {}]
  %s8 = sld [smem:[#allocation0]]
  $region38: #{dqn_forward.1} parent=0
    _
  %s10 = ssub.s32 1, %s8
  %s11 = scalar_select 0, %s10, %s8
  // Predicated region
  $region2: #{dqn_forward.1} parent=0 // pred_check
    _
  $region3: #{dqn_forward.1} parent=0 // pred_check_branch
    %13 = sbr.rel (0) target = $region5
  $region4: #{dqn_forward.1} parent=0 // pred_region
    _
  $region5: #{dqn_forward.1} parent=0 // pred_fallthru
    _
  // Predicated region
  $region6: #{dqn_forward.1} parent=0 // pred_check
    _
  $region7: #{dqn_forward.1} parent=0 // pred_check_branch
    %15 = sbr.rel (0) target = $region9
  $region8: #{dqn_forward.1} parent=0 // pred_region
    _
  $region9: #{dqn_forward.1} parent=0 // pred_fallthru
    _
  // Predicated region
  $region10: #{dqn_forward.1} parent=0 // pred_check
    _
  $region11: #{dqn_forward.1} parent=0 // pred_check_branch
    %17 = sbr.rel (0) target = $region13
  $region12: #{dqn_forward.1} parent=0 // pred_region
    _
  $region13: #{dqn_forward.1} parent=0 // pred_fallthru
    _
  // Predicated region
  $region14: #{dqn_forward.1} parent=0 // pred_check
    _
  $region15: #{dqn_forward.1} parent=0 // pred_check_branch
    %19 = sbr.rel (0) target = $region17
  $region16: #{dqn_forward.1} parent=0 // pred_region
    _
  $region17: #{dqn_forward.1} parent=0 // pred_fallthru
    _
  // Predicated region
  $region18: #{dqn_forward.1} parent=0 // pred_check
    _
  $region19: #{dqn_forward.1} parent=0 // pred_check_branch
    %21 = sbr.rel (0) target = $region21
  $region20: #{dqn_forward.1} parent=0 // pred_region
    _
  $region21: #{dqn_forward.1} parent=0 // pred_fallthru
    _
  // Predicated region
  $region22: #{dqn_forward.1} parent=0 // pred_check
    _
  $region23: #{dqn_forward.1} parent=0 // pred_check_branch
    %23 = sbr.rel (0) target = $region25
  $region24: #{dqn_forward.1} parent=0 // pred_region
    _
  $region25: #{dqn_forward.1} parent=0 // pred_fallthru
    _
  // Predicated region
  $region26: #{dqn_forward.1} parent=0 // pred_check
    _
  $region27: #{dqn_forward.1} parent=0 // pred_check_branch
    %25 = sbr.rel (0) target = $region29
  $region28: #{dqn_forward.1} parent=0 // pred_region
    _
  $region29: #{dqn_forward.1} parent=0 // pred_fallthru
    _
  %v26 = vld [vmem:[%s0] sm:$0xff]
  %v27 = vld [vmem:[%s0 + $0x8] sm:$0xff]
  %v28 = vld [vmem:[%s1] sm:$0xff]
  %v29 = vld [vmem:[%s1 + $0x8] sm:$0xff]
  %v30 = vld [vmem:[%s1 + $0x10] sm:$0xff]
  %v31 = vld [vmem:[%s1 + $0x18] sm:$0xff]
  %v32 = vld [vmem:[%s1 + $0x20] sm:$0xff]
  %v33 = vld [vmem:[%s1 + $0x28] sm:$0xff]
  %v34 = vld [vmem:[%s1 + $0x30] sm:$0xff]
  %v35 = vld [vmem:[%s1 + $0x38] sm:$0xff]
  %v36 = vld [vmem:[%s1 + $0x40] sm:$0xff]
  %v37 = vld [vmem:[%s1 + $0x48] sm:$0xff]
  %v38 = vld [vmem:[%s1 + $0x50] sm:$0xff]
  %v39 = vld [vmem:[%s1 + $0x58] sm:$0xff]
  %v40 = vld [vmem:[%s1 + $0x60] sm:$0xff]
  %v41 = vld [vmem:[%s1 + $0x68] sm:$0xff]
  %v42 = vld [vmem:[%s1 + $0x70] sm:$0xff]
  %v43 = vld [vmem:[%s1 + $0x78] sm:$0xff]
  %v44 = vld [vmem:[%s1 + $0x80] sm:$0xff]
  %v45 = vld [vmem:[%s1 + $0x88] sm:$0xff]
  %v46 = vld [vmem:[%s1 + $0x90] sm:$0xff]
  %v47 = vld [vmem:[%s1 + $0x98] sm:$0xff]
  %v48 = vld [vmem:[%s1 + $0xa0] sm:$0xff]
  %v49 = vld [vmem:[%s1 + $0xa8] sm:$0xff]
  %v50 = vld [vmem:[%s1 + $0xb0] sm:$0xff]
  %v51 = vld [vmem:[%s1 + $0xb8] sm:$0xff]
  %v52 = vld [vmem:[%s1 + $0xc0] sm:$0xff]
  %v53 = vld [vmem:[%s1 + $0xc8] sm:$0xff]
  %v54 = vld [vmem:[%s1 + $0xd0] sm:$0xff]
  %v55 = vld [vmem:[%s1 + $0xd8] sm:$0xff]
  %v56 = vld [vmem:[%s1 + $0xe0] sm:$0xff]
  %v57 = vld [vmem:[%s1 + $0xe8] sm:$0xff]
  %v58 = vld [vmem:[%s1 + $0xf0] sm:$0xff]
  %v59 = vld [vmem:[%s1 + $0xf8] sm:$0xff]
  %v60 = vld [vmem:[%s1 + $0x100] sm:$0xff]
  %v61 = vld [vmem:[%s1 + $0x108] sm:$0xff]
  %v62 = vld [vmem:[%s1 + $0x110] sm:$0xff]
  %v63 = vld [vmem:[%s1 + $0x118] sm:$0xff]
  %v64 = vld [vmem:[%s1 + $0x120] sm:$0xff]
  %v65 = vld [vmem:[%s1 + $0x128] sm:$0xff]
  %v66 = vld [vmem:[%s1 + $0x130] sm:$0xff]
  %v67 = vld [vmem:[%s1 + $0x138] sm:$0xff]
  %v68 = vld [vmem:[%s1 + $0x140] sm:$0xff]
  %v69 = vld [vmem:[%s1 + $0x148] sm:$0xff]
  %v70 = vld [vmem:[%s1 + $0x150] sm:$0xff]
  %v71 = vld [vmem:[%s1 + $0x158] sm:$0xff]
  %v72 = vld [vmem:[%s1 + $0x160] sm:$0xff]
  %v73 = vld [vmem:[%s1 + $0x168] sm:$0xff]
  %v74 = vld [vmem:[%s1 + $0x170] sm:$0xff]
  %v75 = vld [vmem:[%s1 + $0x178] sm:$0xff]
  %v76 = vld [vmem:[%s1 + $0x180] sm:$0xff]
  %v77 = vld [vmem:[%s1 + $0x188] sm:$0xff]
  %v78 = vld [vmem:[%s1 + $0x190] sm:$0xff]
  %v79 = vld [vmem:[%s1 + $0x198] sm:$0xff]
  %v80 = vld [vmem:[%s1 + $0x1a0] sm:$0xff]
  %v81 = vld [vmem:[%s1 + $0x1a8] sm:$0xff]
  %v82 = vld [vmem:[%s1 + $0x1b0] sm:$0xff]
  %v83 = vld [vmem:[%s1 + $0x1b8] sm:$0xff]
  %v84 = vld [vmem:[%s1 + $0x1c0] sm:$0xff]
  %v85 = vld [vmem:[%s1 + $0x1c8] sm:$0xff]
  %v86 = vld [vmem:[%s1 + $0x1d0] sm:$0xff]
  %v87 = vld [vmem:[%s1 + $0x1d8] sm:$0xff]
  %v88 = vld [vmem:[%s1 + $0x1e0] sm:$0xff]
  %v89 = vld [vmem:[%s1 + $0x1e8] sm:$0xff]
  %v90 = vld [vmem:[%s1 + $0x1f0] sm:$0xff]
  %v91 = vld [vmem:[%s1 + $0x1f8] sm:$0xff]
  %v92 = vld [vmem:[%s1 + $0x200] sm:$0xff]
  %v93 = vld [vmem:[%s1 + $0x208] sm:$0xff]
  %v94 = vld [vmem:[%s1 + $0x210] sm:$0xff]
  %v95 = vld [vmem:[%s1 + $0x218] sm:$0xff]
  %v96 = vld [vmem:[%s1 + $0x220] sm:$0xff]
  %v97 = vld [vmem:[%s1 + $0x228] sm:$0xff]
  %v98 = vld [vmem:[%s1 + $0x230] sm:$0xff]
  %v99 = vld [vmem:[%s1 + $0x238] sm:$0xff]
  %v100 = vld [vmem:[%s1 + $0x240] sm:$0xff]
  %v101 = vld [vmem:[%s1 + $0x248] sm:$0xff]
  %v102 = vld [vmem:[%s1 + $0x250] sm:$0xff]
  %v103 = vld [vmem:[%s1 + $0x258] sm:$0xff]
  %v104 = vld [vmem:[%s1 + $0x260] sm:$0xff]
  %v105 = vld [vmem:[%s1 + $0x268] sm:$0xff]
  %v106 = vld [vmem:[%s1 + $0x270] sm:$0xff]
  %v107 = vld [vmem:[%s1 + $0x278] sm:$0xff]
  %v108 = vld [vmem:[%s1 + $0x280] sm:$0xff]
  %v109 = vld [vmem:[%s1 + $0x288] sm:$0xff]
  %v110 = vld [vmem:[%s1 + $0x290] sm:$0xff]
  %v111 = vld [vmem:[%s1 + $0x298] sm:$0xff]
  %v112 = vld [vmem:[%s1 + $0x2a0] sm:$0xff]
  %v113 = vld [vmem:[%s1 + $0x2a8] sm:$0xff]
  %v114 = vld [vmem:[%s1 + $0x2b0] sm:$0xff]
  %v115 = vld [vmem:[%s1 + $0x2b8] sm:$0xff]
  %v116 = vld [vmem:[%s1 + $0x2c0] sm:$0xff]
  %v117 = vld [vmem:[%s1 + $0x2c8] sm:$0xff]
  %v118 = vld [vmem:[%s1 + $0x2d0] sm:$0xff]
  %v119 = vld [vmem:[%s1 + $0x2d8] sm:$0xff]
  %v120 = vld [vmem:[%s1 + $0x2e0] sm:$0xff]
  %v121 = vld [vmem:[%s1 + $0x2e8] sm:$0xff]
  %v122 = vld [vmem:[%s1 + $0x2f0] sm:$0xff]
  %v123 = vld [vmem:[%s1 + $0x2f8] sm:$0xff]
  %v124 = vld [vmem:[%s1 + $0x300] sm:$0xff]
  %v125 = vld [vmem:[%s1 + $0x308] sm:$0xff]
  %v126 = vld [vmem:[%s1 + $0x310] sm:$0xff]
  %v127 = vld [vmem:[%s1 + $0x318] sm:$0xff]
  %v128 = vld [vmem:[%s1 + $0x320] sm:$0xff]
  %v129 = vld [vmem:[%s1 + $0x328] sm:$0xff]
  %v130 = vld [vmem:[%s1 + $0x330] sm:$0xff]
  %v131 = vld [vmem:[%s1 + $0x338] sm:$0xff]
  %v132 = vld [vmem:[%s1 + $0x340] sm:$0xff]
  %v133 = vld [vmem:[%s1 + $0x348] sm:$0xff]
  %v134 = vld [vmem:[%s1 + $0x350] sm:$0xff]
  %v135 = vld [vmem:[%s1 + $0x358] sm:$0xff]
  %v136 = vld [vmem:[%s1 + $0x360] sm:$0xff]
  %v137 = vld [vmem:[%s1 + $0x368] sm:$0xff]
  %v138 = vld [vmem:[%s1 + $0x370] sm:$0xff]
  %v139 = vld [vmem:[%s1 + $0x378] sm:$0xff]
  %v140 = vld [vmem:[%s1 + $0x380] sm:$0xff]
  %v141 = vld [vmem:[%s1 + $0x388] sm:$0xff]
  %v142 = vld [vmem:[%s1 + $0x390] sm:$0xff]
  %v143 = vld [vmem:[%s1 + $0x398] sm:$0xff]
  %v144 = vld [vmem:[%s1 + $0x3a0] sm:$0xff]
  %v145 = vld [vmem:[%s1 + $0x3a8] sm:$0xff]
  %v146 = vld [vmem:[%s1 + $0x3b0] sm:$0xff]
  %v147 = vld [vmem:[%s1 + $0x3b8] sm:$0xff]
  %v148 = vld [vmem:[%s1 + $0x3c0] sm:$0xff]
  %v149 = vld [vmem:[%s1 + $0x3c8] sm:$0xff]
  %v150 = vld [vmem:[%s1 + $0x3d0] sm:$0xff]
  %v151 = vld [vmem:[%s1 + $0x3d8] sm:$0xff]
  %v152 = vld [vmem:[%s1 + $0x3e0] sm:$0xff]
  %v153 = vld [vmem:[%s1 + $0x3e8] sm:$0xff]
  %v154 = vld [vmem:[%s1 + $0x3f0] sm:$0xff]
  %v155 = vld [vmem:[%s1 + $0x3f8] sm:$0xff]
  %v156 = vld [vmem:[%s2] sm:$0xf]
  %v158 = vlaneseq
  %v159 = vshrl.u32 %v158, 7
  %v160 = vsub.s32 0, %v159
  %v161 = vrot.slane %v156, %v160
  %v162 = vlaneseq
  %v163 = vshrl.u32 %v162, 7
  %v164 = vsub.s32 1, %v163
  %v165 = vrot.slane %v156, %v164
  %v166 = vlaneseq
  %v167 = vshrl.u32 %v166, 7
  %v168 = vsub.s32 2, %v167
  %v169 = vrot.slane %v156, %v168
  %v170 = vlaneseq
  %v171 = vshrl.u32 %v170, 7
  %v172 = vsub.s32 3, %v171
  %v173 = vrot.slane %v156, %v172
  %178 = vmatprep.subr.mxu0 %v29
  %179 = vmatpush1.msra.mxu0 %v28
  %180 = vmatprep.subr.mxu0 %v33
  %181 = vmatpush1.msra.mxu0 %v32
  %182 = vmatprep.subr.mxu0 %v37
  %183 = vmatpush1.msra.mxu0 %v36
  %184 = vmatprep.subr.mxu0 %v41
  %185 = vmatpush1.msra.mxu0 %v40
  %186 = vmatprep.subr.mxu0 %v45
  %187 = vmatpush1.msra.mxu0 %v44
  %188 = vmatprep.subr.mxu0 %v49
  %189 = vmatpush1.msra.mxu0 %v48
  %190 = vmatprep.subr.mxu0 %v53
  %191 = vmatpush1.msra.mxu0 %v52
  %192 = vmatprep.subr.mxu0 %v57
  %193 = vmatpush1.msra.mxu0 %v56
  %194 = vmatprep.subr.mxu0 %v61
  %195 = vmatpush1.msra.mxu0 %v60
  %196 = vmatprep.subr.mxu0 %v65
  %197 = vmatpush1.msra.mxu0 %v64
  %198 = vmatprep.subr.mxu0 %v69
  %199 = vmatpush1.msra.mxu0 %v68
  %200 = vmatprep.subr.mxu0 %v73
  %201 = vmatpush1.msra.mxu0 %v72
  %202 = vmatprep.subr.mxu0 %v77
  %203 = vmatpush1.msra.mxu0 %v76
  %204 = vmatprep.subr.mxu0 %v81
  %205 = vmatpush1.msra.mxu0 %v80
  %206 = vmatprep.subr.mxu0 %v85
  %207 = vmatpush1.msra.mxu0 %v84
  %208 = vmatprep.subr.mxu0 %v89
  %209 = vmatpush1.msra.mxu0 %v88
  %210 = vmatprep.subr.mxu0 %v93
  %211 = vmatpush1.msra.mxu0 %v92
  %212 = vmatprep.subr.mxu0 %v97
  %213 = vmatpush1.msra.mxu0 %v96
  %214 = vmatprep.subr.mxu0 %v101
  %215 = vmatpush1.msra.mxu0 %v100
  %216 = vmatprep.subr.mxu0 %v105
  %217 = vmatpush1.msra.mxu0 %v104
  %218 = vmatprep.subr.mxu0 %v109
  %219 = vmatpush1.msra.mxu0 %v108
  %220 = vmatprep.subr.mxu0 %v113
  %221 = vmatpush1.msra.mxu0 %v112
  %222 = vmatprep.subr.mxu0 %v117
  %223 = vmatpush1.msra.mxu0 %v116
  %224 = vmatprep.subr.mxu0 %v121
  %225 = vmatpush1.msra.mxu0 %v120
  %226 = vmatprep.subr.mxu0 %v125
  %227 = vmatpush1.msra.mxu0 %v124
  %228 = vmatprep.subr.mxu0 %v129
  %229 = vmatpush1.msra.mxu0 %v128
  %230 = vmatprep.subr.mxu0 %v133
  %231 = vmatpush1.msra.mxu0 %v132
  %232 = vmatprep.subr.mxu0 %v137
  %233 = vmatpush1.msra.mxu0 %v136
  %234 = vmatprep.subr.mxu0 %v141
  %235 = vmatpush1.msra.mxu0 %v140
  %236 = vmatprep.subr.mxu0 %v145
  %237 = vmatpush1.msra.mxu0 %v144
  %238 = vmatprep.subr.mxu0 %v149
  %239 = vmatpush1.msra.mxu0 %v148
  %240 = vmatprep.subr.mxu0 %v153
  %241 = vmatpush1.msra.mxu0 %v152
  %242 = vmatprep.mubr.f32.mxu0 %v27
  %243 = vmatmul.mubr.f32.gmra.mrb[0].mxu0 %v26
  %v244 = vpop.f32.mrb[0].mxu0
  %v245 = vadd.f32 %v161, %v244
  %v246 = vpop.f32.mrb[0].mxu0
  %v247 = vadd.f32 %v165, %v246
  %248 = vdwg.mxu0
  %249 = vmatprep.subr.mxu0 %v31
  %250 = vmatpush1.msra.mxu0 %v30
  %251 = vmatprep.subr.mxu0 %v35
  %252 = vmatpush1.msra.mxu0 %v34
  %253 = vmatprep.subr.mxu0 %v39
  %254 = vmatpush1.msra.mxu0 %v38
  %255 = vmatprep.subr.mxu0 %v43
  %256 = vmatpush1.msra.mxu0 %v42
  %257 = vmatprep.subr.mxu0 %v47
  %258 = vmatpush1.msra.mxu0 %v46
  %259 = vmatprep.subr.mxu0 %v51
  %260 = vmatpush1.msra.mxu0 %v50
  %261 = vmatprep.subr.mxu0 %v55
  %262 = vmatpush1.msra.mxu0 %v54
  %263 = vmatprep.subr.mxu0 %v59
  %264 = vmatpush1.msra.mxu0 %v58
  %265 = vmatprep.subr.mxu0 %v63
  %266 = vmatpush1.msra.mxu0 %v62
  %267 = vmatprep.subr.mxu0 %v67
  %268 = vmatpush1.msra.mxu0 %v66
  %269 = vmatprep.subr.mxu0 %v71
  %270 = vmatpush1.msra.mxu0 %v70
  %271 = vmatprep.subr.mxu0 %v75
  %272 = vmatpush1.msra.mxu0 %v74
  %273 = vmatprep.subr.mxu0 %v79
  %274 = vmatpush1.msra.mxu0 %v78
  %275 = vmatprep.subr.mxu0 %v83
  %276 = vmatpush1.msra.mxu0 %v82
  %277 = vmatprep.subr.mxu0 %v87
  %278 = vmatpush1.msra.mxu0 %v86
  %279 = vmatprep.subr.mxu0 %v91
  %280 = vmatpush1.msra.mxu0 %v90
  %281 = vmatprep.subr.mxu0 %v95
  %282 = vmatpush1.msra.mxu0 %v94
  %283 = vmatprep.subr.mxu0 %v99
  %284 = vmatpush1.msra.mxu0 %v98
  %285 = vmatprep.subr.mxu0 %v103
  %286 = vmatpush1.msra.mxu0 %v102
  %287 = vmatprep.subr.mxu0 %v107
  %288 = vmatpush1.msra.mxu0 %v106
  %289 = vmatprep.subr.mxu0 %v111
  %290 = vmatpush1.msra.mxu0 %v110
  %291 = vmatprep.subr.mxu0 %v115
  %292 = vmatpush1.msra.mxu0 %v114
  %293 = vmatprep.subr.mxu0 %v119
  %294 = vmatpush1.msra.mxu0 %v118
  %295 = vmatprep.subr.mxu0 %v123
  %296 = vmatpush1.msra.mxu0 %v122
  %297 = vmatprep.subr.mxu0 %v127
  %298 = vmatpush1.msra.mxu0 %v126
  %299 = vmatprep.subr.mxu0 %v131
  %300 = vmatpush1.msra.mxu0 %v130
  %301 = vmatprep.subr.mxu0 %v135
  %302 = vmatpush1.msra.mxu0 %v134
  %303 = vmatprep.subr.mxu0 %v139
  %304 = vmatpush1.msra.mxu0 %v138
  %305 = vmatprep.subr.mxu0 %v143
  %306 = vmatpush1.msra.mxu0 %v142
  %307 = vmatprep.subr.mxu0 %v147
  %308 = vmatpush1.msra.mxu0 %v146
  %309 = vmatprep.subr.mxu0 %v151
  %310 = vmatpush1.msra.mxu0 %v150
  %311 = vmatprep.subr.mxu0 %v155
  %312 = vmatpush1.msra.mxu0 %v154
  %313 = vmatprep.mubr.f32.mxu0 %v27
  %314 = vmatmul.mubr.f32.gmra.mrb[0].mxu0 %v26
  %v315 = vpop.f32.mrb[0].mxu0
  %v316 = vadd.f32 %v169, %v315
  %v317 = vpop.f32.mrb[0].mxu0
  %v318 = vadd.f32 %v173, %v317
  %319 = vdwg.mxu0
  %v320 = vmax.f32 %v245, 0.0
  %v321 = vmax.f32 %v247, 0.0
  %v322 = vmax.f32 %v316, 0.0
  %v323 = vmax.f32 %v318, 0.0
  %v324 = vld [vmem:[%s3] sm:$0xff]
  %v325 = vld [vmem:[%s3 + $0x8] sm:$0xff]
  %v326 = vld [vmem:[%s3 + $0x10] sm:$0xff]
  %v327 = vld [vmem:[%s3 + $0x18] sm:$0xff]
  %v328 = vld [vmem:[%s3 + $0x20] sm:$0xff]
  %v329 = vld [vmem:[%s3 + $0x28] sm:$0xff]
  %v330 = vld [vmem:[%s3 + $0x30] sm:$0xff]
  %v331 = vld [vmem:[%s3 + $0x38] sm:$0xff]
  %v332 = vld [vmem:[%s3 + $0x40] sm:$0xff]
  %v333 = vld [vmem:[%s3 + $0x48] sm:$0xff]
  %v334 = vld [vmem:[%s3 + $0x50] sm:$0xff]
  %v335 = vld [vmem:[%s3 + $0x58] sm:$0xff]
  %v336 = vld [vmem:[%s3 + $0x60] sm:$0xff]
  %v337 = vld [vmem:[%s3 + $0x68] sm:$0xff]
  %v338 = vld [vmem:[%s3 + $0x70] sm:$0xff]
  %v339 = vld [vmem:[%s3 + $0x78] sm:$0xff]
  %v340 = vld [vmem:[%s3 + $0x80] sm:$0xff]
  %v341 = vld [vmem:[%s3 + $0x88] sm:$0xff]
  %v342 = vld [vmem:[%s3 + $0x90] sm:$0xff]
  %v343 = vld [vmem:[%s3 + $0x98] sm:$0xff]
  %v344 = vld [vmem:[%s3 + $0xa0] sm:$0xff]
  %v345 = vld [vmem:[%s3 + $0xa8] sm:$0xff]
  %v346 = vld [vmem:[%s3 + $0xb0] sm:$0xff]
  %v347 = vld [vmem:[%s3 + $0xb8] sm:$0xff]
  %v348 = vld [vmem:[%s3 + $0xc0] sm:$0xff]
  %v349 = vld [vmem:[%s3 + $0xc8] sm:$0xff]
  %v350 = vld [vmem:[%s3 + $0xd0] sm:$0xff]
  %v351 = vld [vmem:[%s3 + $0xd8] sm:$0xff]
  %v352 = vld [vmem:[%s3 + $0xe0] sm:$0xff]
  %v353 = vld [vmem:[%s3 + $0xe8] sm:$0xff]
  %v354 = vld [vmem:[%s3 + $0xf0] sm:$0xff]
  %v355 = vld [vmem:[%s3 + $0xf8] sm:$0xff]
  %v356 = vld [vmem:[%s3 + $0x100] sm:$0xff]
  %v357 = vld [vmem:[%s3 + $0x108] sm:$0xff]
  %v358 = vld [vmem:[%s3 + $0x110] sm:$0xff]
  %v359 = vld [vmem:[%s3 + $0x118] sm:$0xff]
  %v360 = vld [vmem:[%s3 + $0x120] sm:$0xff]
  %v361 = vld [vmem:[%s3 + $0x128] sm:$0xff]
  %v362 = vld [vmem:[%s3 + $0x130] sm:$0xff]
  %v363 = vld [vmem:[%s3 + $0x138] sm:$0xff]
  %v364 = vld [vmem:[%s3 + $0x140] sm:$0xff]
  %v365 = vld [vmem:[%s3 + $0x148] sm:$0xff]
  %v366 = vld [vmem:[%s3 + $0x150] sm:$0xff]
  %v367 = vld [vmem:[%s3 + $0x158] sm:$0xff]
  %v368 = vld [vmem:[%s3 + $0x160] sm:$0xff]
  %v369 = vld [vmem:[%s3 + $0x168] sm:$0xff]
  %v370 = vld [vmem:[%s3 + $0x170] sm:$0xff]
  %v371 = vld [vmem:[%s3 + $0x178] sm:$0xff]
  %v372 = vld [vmem:[%s3 + $0x180] sm:$0xff]
  %v373 = vld [vmem:[%s3 + $0x188] sm:$0xff]
  %v374 = vld [vmem:[%s3 + $0x190] sm:$0xff]
  %v375 = vld [vmem:[%s3 + $0x198] sm:$0xff]
  %v376 = vld [vmem:[%s3 + $0x1a0] sm:$0xff]
  %v377 = vld [vmem:[%s3 + $0x1a8] sm:$0xff]
  %v378 = vld [vmem:[%s3 + $0x1b0] sm:$0xff]
  %v379 = vld [vmem:[%s3 + $0x1b8] sm:$0xff]
  %v380 = vld [vmem:[%s3 + $0x1c0] sm:$0xff]
  %v381 = vld [vmem:[%s3 + $0x1c8] sm:$0xff]
  %v382 = vld [vmem:[%s3 + $0x1d0] sm:$0xff]
  %v383 = vld [vmem:[%s3 + $0x1d8] sm:$0xff]
  %v384 = vld [vmem:[%s3 + $0x1e0] sm:$0xff]
  %v385 = vld [vmem:[%s3 + $0x1e8] sm:$0xff]
  %v386 = vld [vmem:[%s3 + $0x1f0] sm:$0xff]
  %v387 = vld [vmem:[%s3 + $0x1f8] sm:$0xff]
  %v388 = vld [vmem:[%s3 + $0x200] sm:$0xff]
  %v389 = vld [vmem:[%s3 + $0x208] sm:$0xff]
  %v390 = vld [vmem:[%s3 + $0x210] sm:$0xff]
  %v391 = vld [vmem:[%s3 + $0x218] sm:$0xff]
  %v392 = vld [vmem:[%s3 + $0x220] sm:$0xff]
  %v393 = vld [vmem:[%s3 + $0x228] sm:$0xff]
  %v394 = vld [vmem:[%s3 + $0x230] sm:$0xff]
  %v395 = vld [vmem:[%s3 + $0x238] sm:$0xff]
  %v396 = vld [vmem:[%s3 + $0x240] sm:$0xff]
  %v397 = vld [vmem:[%s3 + $0x248] sm:$0xff]
  %v398 = vld [vmem:[%s3 + $0x250] sm:$0xff]
  %v399 = vld [vmem:[%s3 + $0x258] sm:$0xff]
  %v400 = vld [vmem:[%s3 + $0x260] sm:$0xff]
  %v401 = vld [vmem:[%s3 + $0x268] sm:$0xff]
  %v402 = vld [vmem:[%s3 + $0x270] sm:$0xff]
  %v403 = vld [vmem:[%s3 + $0x278] sm:$0xff]
  %v404 = vld [vmem:[%s3 + $0x280] sm:$0xff]
  %v405 = vld [vmem:[%s3 + $0x288] sm:$0xff]
  %v406 = vld [vmem:[%s3 + $0x290] sm:$0xff]
  %v407 = vld [vmem:[%s3 + $0x298] sm:$0xff]
  %v408 = vld [vmem:[%s3 + $0x2a0] sm:$0xff]
  %v409 = vld [vmem:[%s3 + $0x2a8] sm:$0xff]
  %v410 = vld [vmem:[%s3 + $0x2b0] sm:$0xff]
  %v411 = vld [vmem:[%s3 + $0x2b8] sm:$0xff]
  %v412 = vld [vmem:[%s3 + $0x2c0] sm:$0xff]
  %v413 = vld [vmem:[%s3 + $0x2c8] sm:$0xff]
  %v414 = vld [vmem:[%s3 + $0x2d0] sm:$0xff]
  %v415 = vld [vmem:[%s3 + $0x2d8] sm:$0xff]
  %v416 = vld [vmem:[%s3 + $0x2e0] sm:$0xff]
  %v417 = vld [vmem:[%s3 + $0x2e8] sm:$0xff]
  %v418 = vld [vmem:[%s3 + $0x2f0] sm:$0xff]
  %v419 = vld [vmem:[%s3 + $0x2f8] sm:$0xff]
  %v420 = vld [vmem:[%s3 + $0x300] sm:$0xff]
  %v421 = vld [vmem:[%s3 + $0x308] sm:$0xff]
  %v422 = vld [vmem:[%s3 + $0x310] sm:$0xff]
  %v423 = vld [vmem:[%s3 + $0x318] sm:$0xff]
  %v424 = vld [vmem:[%s3 + $0x320] sm:$0xff]
  %v425 = vld [vmem:[%s3 + $0x328] sm:$0xff]
  %v426 = vld [vmem:[%s3 + $0x330] sm:$0xff]
  %v427 = vld [vmem:[%s3 + $0x338] sm:$0xff]
  %v428 = vld [vmem:[%s3 + $0x340] sm:$0xff]
  %v429 = vld [vmem:[%s3 + $0x348] sm:$0xff]
  %v430 = vld [vmem:[%s3 + $0x350] sm:$0xff]
  %v431 = vld [vmem:[%s3 + $0x358] sm:$0xff]
  %v432 = vld [vmem:[%s3 + $0x360] sm:$0xff]
  %v433 = vld [vmem:[%s3 + $0x368] sm:$0xff]
  %v434 = vld [vmem:[%s3 + $0x370] sm:$0xff]
  %v435 = vld [vmem:[%s3 + $0x378] sm:$0xff]
  %v436 = vld [vmem:[%s3 + $0x380] sm:$0xff]
  %v437 = vld [vmem:[%s3 + $0x388] sm:$0xff]
  %v438 = vld [vmem:[%s3 + $0x390] sm:$0xff]
  %v439 = vld [vmem:[%s3 + $0x398] sm:$0xff]
  %v440 = vld [vmem:[%s3 + $0x3a0] sm:$0xff]
  %v441 = vld [vmem:[%s3 + $0x3a8] sm:$0xff]
  %v442 = vld [vmem:[%s3 + $0x3b0] sm:$0xff]
  %v443 = vld [vmem:[%s3 + $0x3b8] sm:$0xff]
  %v444 = vld [vmem:[%s3 + $0x3c0] sm:$0xff]
  %v445 = vld [vmem:[%s3 + $0x3c8] sm:$0xff]
  %v446 = vld [vmem:[%s3 + $0x3d0] sm:$0xff]
  %v447 = vld [vmem:[%s3 + $0x3d8] sm:$0xff]
  %v448 = vld [vmem:[%s3 + $0x3e0] sm:$0xff]
  %v449 = vld [vmem:[%s3 + $0x3e8] sm:$0xff]
  %v450 = vld [vmem:[%s3 + $0x3f0] sm:$0xff]
  %v451 = vld [vmem:[%s3 + $0x3f8] sm:$0xff]
  %v452 = vld [vmem:[%s3 + $0x400] sm:$0xff]
  %v453 = vld [vmem:[%s3 + $0x408] sm:$0xff]
  %v454 = vld [vmem:[%s3 + $0x410] sm:$0xff]
  %v455 = vld [vmem:[%s3 + $0x418] sm:$0xff]
  %v456 = vld [vmem:[%s3 + $0x420] sm:$0xff]
  %v457 = vld [vmem:[%s3 + $0x428] sm:$0xff]
  %v458 = vld [vmem:[%s3 + $0x430] sm:$0xff]
  %v459 = vld [vmem:[%s3 + $0x438] sm:$0xff]
  %v460 = vld [vmem:[%s3 + $0x440] sm:$0xff]
  %v461 = vld [vmem:[%s3 + $0x448] sm:$0xff]
  %v462 = vld [vmem:[%s3 + $0x450] sm:$0xff]
  %v463 = vld [vmem:[%s3 + $0x458] sm:$0xff]
  %v464 = vld [vmem:[%s3 + $0x460] sm:$0xff]
  %v465 = vld [vmem:[%s3 + $0x468] sm:$0xff]
  %v466 = vld [vmem:[%s3 + $0x470] sm:$0xff]
  %v467 = vld [vmem:[%s3 + $0x478] sm:$0xff]
  %v468 = vld [vmem:[%s3 + $0x480] sm:$0xff]
  %v469 = vld [vmem:[%s3 + $0x488] sm:$0xff]
  %v470 = vld [vmem:[%s3 + $0x490] sm:$0xff]
  %v471 = vld [vmem:[%s3 + $0x498] sm:$0xff]
  %v472 = vld [vmem:[%s3 + $0x4a0] sm:$0xff]
  %v473 = vld [vmem:[%s3 + $0x4a8] sm:$0xff]
  %v474 = vld [vmem:[%s3 + $0x4b0] sm:$0xff]
  %v475 = vld [vmem:[%s3 + $0x4b8] sm:$0xff]
  %v476 = vld [vmem:[%s3 + $0x4c0] sm:$0xff]
  %v477 = vld [vmem:[%s3 + $0x4c8] sm:$0xff]
  %v478 = vld [vmem:[%s3 + $0x4d0] sm:$0xff]
  %v479 = vld [vmem:[%s3 + $0x4d8] sm:$0xff]
  %v480 = vld [vmem:[%s3 + $0x4e0] sm:$0xff]
  %v481 = vld [vmem:[%s3 + $0x4e8] sm:$0xff]
  %v482 = vld [vmem:[%s3 + $0x4f0] sm:$0xff]
  %v483 = vld [vmem:[%s3 + $0x4f8] sm:$0xff]
  %v484 = vld [vmem:[%s3 + $0x500] sm:$0xff]
  %v485 = vld [vmem:[%s3 + $0x508] sm:$0xff]
  %v486 = vld [vmem:[%s3 + $0x510] sm:$0xff]
  %v487 = vld [vmem:[%s3 + $0x518] sm:$0xff]
  %v488 = vld [vmem:[%s3 + $0x520] sm:$0xff]
  %v489 = vld [vmem:[%s3 + $0x528] sm:$0xff]
  %v490 = vld [vmem:[%s3 + $0x530] sm:$0xff]
  %v491 = vld [vmem:[%s3 + $0x538] sm:$0xff]
  %v492 = vld [vmem:[%s3 + $0x540] sm:$0xff]
  %v493 = vld [vmem:[%s3 + $0x548] sm:$0xff]
  %v494 = vld [vmem:[%s3 + $0x550] sm:$0xff]
  %v495 = vld [vmem:[%s3 + $0x558] sm:$0xff]
  %v496 = vld [vmem:[%s3 + $0x560] sm:$0xff]
  %v497 = vld [vmem:[%s3 + $0x568] sm:$0xff]
  %v498 = vld [vmem:[%s3 + $0x570] sm:$0xff]
  %v499 = vld [vmem:[%s3 + $0x578] sm:$0xff]
  %v500 = vld [vmem:[%s3 + $0x580] sm:$0xff]
  %v501 = vld [vmem:[%s3 + $0x588] sm:$0xff]
  %v502 = vld [vmem:[%s3 + $0x590] sm:$0xff]
  %v503 = vld [vmem:[%s3 + $0x598] sm:$0xff]
  %v504 = vld [vmem:[%s3 + $0x5a0] sm:$0xff]
  %v505 = vld [vmem:[%s3 + $0x5a8] sm:$0xff]
  %v506 = vld [vmem:[%s3 + $0x5b0] sm:$0xff]
  %v507 = vld [vmem:[%s3 + $0x5b8] sm:$0xff]
  %v508 = vld [vmem:[%s3 + $0x5c0] sm:$0xff]
  %v509 = vld [vmem:[%s3 + $0x5c8] sm:$0xff]
  %v510 = vld [vmem:[%s3 + $0x5d0] sm:$0xff]
  %v511 = vld [vmem:[%s3 + $0x5d8] sm:$0xff]
  %v512 = vld [vmem:[%s3 + $0x5e0] sm:$0xff]
  %v513 = vld [vmem:[%s3 + $0x5e8] sm:$0xff]
  %v514 = vld [vmem:[%s3 + $0x5f0] sm:$0xff]
  %v515 = vld [vmem:[%s3 + $0x5f8] sm:$0xff]
  %v516 = vld [vmem:[%s3 + $0x600] sm:$0xff]
  %v517 = vld [vmem:[%s3 + $0x608] sm:$0xff]
  %v518 = vld [vmem:[%s3 + $0x610] sm:$0xff]
  %v519 = vld [vmem:[%s3 + $0x618] sm:$0xff]
  %v520 = vld [vmem:[%s3 + $0x620] sm:$0xff]
  %v521 = vld [vmem:[%s3 + $0x628] sm:$0xff]
  %v522 = vld [vmem:[%s3 + $0x630] sm:$0xff]
  %v523 = vld [vmem:[%s3 + $0x638] sm:$0xff]
  %v524 = vld [vmem:[%s3 + $0x640] sm:$0xff]
  %v525 = vld [vmem:[%s3 + $0x648] sm:$0xff]
  %v526 = vld [vmem:[%s3 + $0x650] sm:$0xff]
  %v527 = vld [vmem:[%s3 + $0x658] sm:$0xff]
  %v528 = vld [vmem:[%s3 + $0x660] sm:$0xff]
  %v529 = vld [vmem:[%s3 + $0x668] sm:$0xff]
  %v530 = vld [vmem:[%s3 + $0x670] sm:$0xff]
  %v531 = vld [vmem:[%s3 + $0x678] sm:$0xff]
  %v532 = vld [vmem:[%s3 + $0x680] sm:$0xff]
  %v533 = vld [vmem:[%s3 + $0x688] sm:$0xff]
  %v534 = vld [vmem:[%s3 + $0x690] sm:$0xff]
  %v535 = vld [vmem:[%s3 + $0x698] sm:$0xff]
  %v536 = vld [vmem:[%s3 + $0x6a0] sm:$0xff]
  %v537 = vld [vmem:[%s3 + $0x6a8] sm:$0xff]
  %v538 = vld [vmem:[%s3 + $0x6b0] sm:$0xff]
  %v539 = vld [vmem:[%s3 + $0x6b8] sm:$0xff]
  %v540 = vld [vmem:[%s3 + $0x6c0] sm:$0xff]
  %v541 = vld [vmem:[%s3 + $0x6c8] sm:$0xff]
  %v542 = vld [vmem:[%s3 + $0x6d0] sm:$0xff]
  %v543 = vld [vmem:[%s3 + $0x6d8] sm:$0xff]
  %v544 = vld [vmem:[%s3 + $0x6e0] sm:$0xff]
  %v545 = vld [vmem:[%s3 + $0x6e8] sm:$0xff]
  %v546 = vld [vmem:[%s3 + $0x6f0] sm:$0xff]
  %v547 = vld [vmem:[%s3 + $0x6f8] sm:$0xff]
  %v548 = vld [vmem:[%s3 + $0x700] sm:$0xff]
  %v549 = vld [vmem:[%s3 + $0x708] sm:$0xff]
  %v550 = vld [vmem:[%s3 + $0x710] sm:$0xff]
  %v551 = vld [vmem:[%s3 + $0x718] sm:$0xff]
  %v552 = vld [vmem:[%s3 + $0x720] sm:$0xff]
  %v553 = vld [vmem:[%s3 + $0x728] sm:$0xff]
  %v554 = vld [vmem:[%s3 + $0x730] sm:$0xff]
  %v555 = vld [vmem:[%s3 + $0x738] sm:$0xff]
  %v556 = vld [vmem:[%s3 + $0x740] sm:$0xff]
  %v557 = vld [vmem:[%s3 + $0x748] sm:$0xff]
  %v558 = vld [vmem:[%s3 + $0x750] sm:$0xff]
  %v559 = vld [vmem:[%s3 + $0x758] sm:$0xff]
  %v560 = vld [vmem:[%s3 + $0x760] sm:$0xff]
  %v561 = vld [vmem:[%s3 + $0x768] sm:$0xff]
  %v562 = vld [vmem:[%s3 + $0x770] sm:$0xff]
  %v563 = vld [vmem:[%s3 + $0x778] sm:$0xff]
  %v564 = vld [vmem:[%s3 + $0x780] sm:$0xff]
  %v565 = vld [vmem:[%s3 + $0x788] sm:$0xff]
  %v566 = vld [vmem:[%s3 + $0x790] sm:$0xff]
  %v567 = vld [vmem:[%s3 + $0x798] sm:$0xff]
  %v568 = vld [vmem:[%s3 + $0x7a0] sm:$0xff]
  %v569 = vld [vmem:[%s3 + $0x7a8] sm:$0xff]
  %v570 = vld [vmem:[%s3 + $0x7b0] sm:$0xff]
  %v571 = vld [vmem:[%s3 + $0x7b8] sm:$0xff]
  %v572 = vld [vmem:[%s3 + $0x7c0] sm:$0xff]
  %v573 = vld [vmem:[%s3 + $0x7c8] sm:$0xff]
  %v574 = vld [vmem:[%s3 + $0x7d0] sm:$0xff]
  %v575 = vld [vmem:[%s3 + $0x7d8] sm:$0xff]
  %v576 = vld [vmem:[%s3 + $0x7e0] sm:$0xff]
  %v577 = vld [vmem:[%s3 + $0x7e8] sm:$0xff]
  %v578 = vld [vmem:[%s3 + $0x7f0] sm:$0xff]
  %v579 = vld [vmem:[%s3 + $0x7f8] sm:$0xff]
  %v580 = vld [vmem:[%s3 + $0x800] sm:$0xff]
  %v581 = vld [vmem:[%s3 + $0x808] sm:$0xff]
  %v582 = vld [vmem:[%s3 + $0x810] sm:$0xff]
  %v583 = vld [vmem:[%s3 + $0x818] sm:$0xff]
  %v584 = vld [vmem:[%s3 + $0x820] sm:$0xff]
  %v585 = vld [vmem:[%s3 + $0x828] sm:$0xff]
  %v586 = vld [vmem:[%s3 + $0x830] sm:$0xff]
  %v587 = vld [vmem:[%s3 + $0x838] sm:$0xff]
  %v588 = vld [vmem:[%s3 + $0x840] sm:$0xff]
  %v589 = vld [vmem:[%s3 + $0x848] sm:$0xff]
  %v590 = vld [vmem:[%s3 + $0x850] sm:$0xff]
  %v591 = vld [vmem:[%s3 + $0x858] sm:$0xff]
  %v592 = vld [vmem:[%s3 + $0x860] sm:$0xff]
  %v593 = vld [vmem:[%s3 + $0x868] sm:$0xff]
  %v594 = vld [vmem:[%s3 + $0x870] sm:$0xff]
  %v595 = vld [vmem:[%s3 + $0x878] sm:$0xff]
  %v596 = vld [vmem:[%s3 + $0x880] sm:$0xff]
  %v597 = vld [vmem:[%s3 + $0x888] sm:$0xff]
  %v598 = vld [vmem:[%s3 + $0x890] sm:$0xff]
  %v599 = vld [vmem:[%s3 + $0x898] sm:$0xff]
  %v600 = vld [vmem:[%s3 + $0x8a0] sm:$0xff]
  %v601 = vld [vmem:[%s3 + $0x8a8] sm:$0xff]
  %v602 = vld [vmem:[%s3 + $0x8b0] sm:$0xff]
  %v603 = vld [vmem:[%s3 + $0x8b8] sm:$0xff]
  %v604 = vld [vmem:[%s3 + $0x8c0] sm:$0xff]
  %v605 = vld [vmem:[%s3 + $0x8c8] sm:$0xff]
  %v606 = vld [vmem:[%s3 + $0x8d0] sm:$0xff]
  %v607 = vld [vmem:[%s3 + $0x8d8] sm:$0xff]
  %v608 = vld [vmem:[%s3 + $0x8e0] sm:$0xff]
  %v609 = vld [vmem:[%s3 + $0x8e8] sm:$0xff]
  %v610 = vld [vmem:[%s3 + $0x8f0] sm:$0xff]
  %v611 = vld [vmem:[%s3 + $0x8f8] sm:$0xff]
  %v612 = vld [vmem:[%s3 + $0x900] sm:$0xff]
  %v613 = vld [vmem:[%s3 + $0x908] sm:$0xff]
  %v614 = vld [vmem:[%s3 + $0x910] sm:$0xff]
  %v615 = vld [vmem:[%s3 + $0x918] sm:$0xff]
  %v616 = vld [vmem:[%s3 + $0x920] sm:$0xff]
  %v617 = vld [vmem:[%s3 + $0x928] sm:$0xff]
  %v618 = vld [vmem:[%s3 + $0x930] sm:$0xff]
  %v619 = vld [vmem:[%s3 + $0x938] sm:$0xff]
  %v620 = vld [vmem:[%s3 + $0x940] sm:$0xff]
  %v621 = vld [vmem:[%s3 + $0x948] sm:$0xff]
  %v622 = vld [vmem:[%s3 + $0x950] sm:$0xff]
  %v623 = vld [vmem:[%s3 + $0x958] sm:$0xff]
  %v624 = vld [vmem:[%s3 + $0x960] sm:$0xff]
  %v625 = vld [vmem:[%s3 + $0x968] sm:$0xff]
  %v626 = vld [vmem:[%s3 + $0x970] sm:$0xff]
  %v627 = vld [vmem:[%s3 + $0x978] sm:$0xff]
  %v628 = vld [vmem:[%s3 + $0x980] sm:$0xff]
  %v629 = vld [vmem:[%s3 + $0x988] sm:$0xff]
  %v630 = vld [vmem:[%s3 + $0x990] sm:$0xff]
  %v631 = vld [vmem:[%s3 + $0x998] sm:$0xff]
  %v632 = vld [vmem:[%s3 + $0x9a0] sm:$0xff]
  %v633 = vld [vmem:[%s3 + $0x9a8] sm:$0xff]
  %v634 = vld [vmem:[%s3 + $0x9b0] sm:$0xff]
  %v635 = vld [vmem:[%s3 + $0x9b8] sm:$0xff]
  %v636 = vld [vmem:[%s3 + $0x9c0] sm:$0xff]
  %v637 = vld [vmem:[%s3 + $0x9c8] sm:$0xff]
  %v638 = vld [vmem:[%s3 + $0x9d0] sm:$0xff]
  %v639 = vld [vmem:[%s3 + $0x9d8] sm:$0xff]
  %v640 = vld [vmem:[%s3 + $0x9e0] sm:$0xff]
  %v641 = vld [vmem:[%s3 + $0x9e8] sm:$0xff]
  %v642 = vld [vmem:[%s3 + $0x9f0] sm:$0xff]
  %v643 = vld [vmem:[%s3 + $0x9f8] sm:$0xff]
  %v644 = vld [vmem:[%s3 + $0xa00] sm:$0xff]
  %v645 = vld [vmem:[%s3 + $0xa08] sm:$0xff]
  %v646 = vld [vmem:[%s3 + $0xa10] sm:$0xff]
  %v647 = vld [vmem:[%s3 + $0xa18] sm:$0xff]
  %v648 = vld [vmem:[%s3 + $0xa20] sm:$0xff]
  %v649 = vld [vmem:[%s3 + $0xa28] sm:$0xff]
  %v650 = vld [vmem:[%s3 + $0xa30] sm:$0xff]
  %v651 = vld [vmem:[%s3 + $0xa38] sm:$0xff]
  %v652 = vld [vmem:[%s3 + $0xa40] sm:$0xff]
  %v653 = vld [vmem:[%s3 + $0xa48] sm:$0xff]
  %v654 = vld [vmem:[%s3 + $0xa50] sm:$0xff]
  %v655 = vld [vmem:[%s3 + $0xa58] sm:$0xff]
  %v656 = vld [vmem:[%s3 + $0xa60] sm:$0xff]
  %v657 = vld [vmem:[%s3 + $0xa68] sm:$0xff]
  %v658 = vld [vmem:[%s3 + $0xa70] sm:$0xff]
  %v659 = vld [vmem:[%s3 + $0xa78] sm:$0xff]
  %v660 = vld [vmem:[%s3 + $0xa80] sm:$0xff]
  %v661 = vld [vmem:[%s3 + $0xa88] sm:$0xff]
  %v662 = vld [vmem:[%s3 + $0xa90] sm:$0xff]
  %v663 = vld [vmem:[%s3 + $0xa98] sm:$0xff]
  %v664 = vld [vmem:[%s3 + $0xaa0] sm:$0xff]
  %v665 = vld [vmem:[%s3 + $0xaa8] sm:$0xff]
  %v666 = vld [vmem:[%s3 + $0xab0] sm:$0xff]
  %v667 = vld [vmem:[%s3 + $0xab8] sm:$0xff]
  %v668 = vld [vmem:[%s3 + $0xac0] sm:$0xff]
  %v669 = vld [vmem:[%s3 + $0xac8] sm:$0xff]
  %v670 = vld [vmem:[%s3 + $0xad0] sm:$0xff]
  %v671 = vld [vmem:[%s3 + $0xad8] sm:$0xff]
  %v672 = vld [vmem:[%s3 + $0xae0] sm:$0xff]
  %v673 = vld [vmem:[%s3 + $0xae8] sm:$0xff]
  %v674 = vld [vmem:[%s3 + $0xaf0] sm:$0xff]
  %v675 = vld [vmem:[%s3 + $0xaf8] sm:$0xff]
  %v676 = vld [vmem:[%s3 + $0xb00] sm:$0xff]
  %v677 = vld [vmem:[%s3 + $0xb08] sm:$0xff]
  %v678 = vld [vmem:[%s3 + $0xb10] sm:$0xff]
  %v679 = vld [vmem:[%s3 + $0xb18] sm:$0xff]
  %v680 = vld [vmem:[%s3 + $0xb20] sm:$0xff]
  %v681 = vld [vmem:[%s3 + $0xb28] sm:$0xff]
  %v682 = vld [vmem:[%s3 + $0xb30] sm:$0xff]
  %v683 = vld [vmem:[%s3 + $0xb38] sm:$0xff]
  %v684 = vld [vmem:[%s3 + $0xb40] sm:$0xff]
  %v685 = vld [vmem:[%s3 + $0xb48] sm:$0xff]
  %v686 = vld [vmem:[%s3 + $0xb50] sm:$0xff]
  %v687 = vld [vmem:[%s3 + $0xb58] sm:$0xff]
  %v688 = vld [vmem:[%s3 + $0xb60] sm:$0xff]
  %v689 = vld [vmem:[%s3 + $0xb68] sm:$0xff]
  %v690 = vld [vmem:[%s3 + $0xb70] sm:$0xff]
  %v691 = vld [vmem:[%s3 + $0xb78] sm:$0xff]
  %v692 = vld [vmem:[%s3 + $0xb80] sm:$0xff]
  %v693 = vld [vmem:[%s3 + $0xb88] sm:$0xff]
  %v694 = vld [vmem:[%s3 + $0xb90] sm:$0xff]
  %v695 = vld [vmem:[%s3 + $0xb98] sm:$0xff]
  %v696 = vld [vmem:[%s3 + $0xba0] sm:$0xff]
  %v697 = vld [vmem:[%s3 + $0xba8] sm:$0xff]
  %v698 = vld [vmem:[%s3 + $0xbb0] sm:$0xff]
  %v699 = vld [vmem:[%s3 + $0xbb8] sm:$0xff]
  %v700 = vld [vmem:[%s3 + $0xbc0] sm:$0xff]
  %v701 = vld [vmem:[%s3 + $0xbc8] sm:$0xff]
  %v702 = vld [vmem:[%s3 + $0xbd0] sm:$0xff]
  %v703 = vld [vmem:[%s3 + $0xbd8] sm:$0xff]
  %v704 = vld [vmem:[%s3 + $0xbe0] sm:$0xff]
  %v705 = vld [vmem:[%s3 + $0xbe8] sm:$0xff]
  %v706 = vld [vmem:[%s3 + $0xbf0] sm:$0xff]
  %v707 = vld [vmem:[%s3 + $0xbf8] sm:$0xff]
  %v708 = vld [vmem:[%s3 + $0xc00] sm:$0xff]
  %v709 = vld [vmem:[%s3 + $0xc08] sm:$0xff]
  %v710 = vld [vmem:[%s3 + $0xc10] sm:$0xff]
  %v711 = vld [vmem:[%s3 + $0xc18] sm:$0xff]
  %v712 = vld [vmem:[%s3 + $0xc20] sm:$0xff]
  %v713 = vld [vmem:[%s3 + $0xc28] sm:$0xff]
  %v714 = vld [vmem:[%s3 + $0xc30] sm:$0xff]
  %v715 = vld [vmem:[%s3 + $0xc38] sm:$0xff]
  %v716 = vld [vmem:[%s3 + $0xc40] sm:$0xff]
  %v717 = vld [vmem:[%s3 + $0xc48] sm:$0xff]
  %v718 = vld [vmem:[%s3 + $0xc50] sm:$0xff]
  %v719 = vld [vmem:[%s3 + $0xc58] sm:$0xff]
  %v720 = vld [vmem:[%s3 + $0xc60] sm:$0xff]
  %v721 = vld [vmem:[%s3 + $0xc68] sm:$0xff]
  %v722 = vld [vmem:[%s3 + $0xc70] sm:$0xff]
  %v723 = vld [vmem:[%s3 + $0xc78] sm:$0xff]
  %v724 = vld [vmem:[%s3 + $0xc80] sm:$0xff]
  %v725 = vld [vmem:[%s3 + $0xc88] sm:$0xff]
  %v726 = vld [vmem:[%s3 + $0xc90] sm:$0xff]
  %v727 = vld [vmem:[%s3 + $0xc98] sm:$0xff]
  %v728 = vld [vmem:[%s3 + $0xca0] sm:$0xff]
  %v729 = vld [vmem:[%s3 + $0xca8] sm:$0xff]
  %v730 = vld [vmem:[%s3 + $0xcb0] sm:$0xff]
  %v731 = vld [vmem:[%s3 + $0xcb8] sm:$0xff]
  %v732 = vld [vmem:[%s3 + $0xcc0] sm:$0xff]
  %v733 = vld [vmem:[%s3 + $0xcc8] sm:$0xff]
  %v734 = vld [vmem:[%s3 + $0xcd0] sm:$0xff]
  %v735 = vld [vmem:[%s3 + $0xcd8] sm:$0xff]
  %v736 = vld [vmem:[%s3 + $0xce0] sm:$0xff]
  %v737 = vld [vmem:[%s3 + $0xce8] sm:$0xff]
  %v738 = vld [vmem:[%s3 + $0xcf0] sm:$0xff]
  %v739 = vld [vmem:[%s3 + $0xcf8] sm:$0xff]
  %v740 = vld [vmem:[%s3 + $0xd00] sm:$0xff]
  %v741 = vld [vmem:[%s3 + $0xd08] sm:$0xff]
  %v742 = vld [vmem:[%s3 + $0xd10] sm:$0xff]
  %v743 = vld [vmem:[%s3 + $0xd18] sm:$0xff]
  %v744 = vld [vmem:[%s3 + $0xd20] sm:$0xff]
  %v745 = vld [vmem:[%s3 + $0xd28] sm:$0xff]
  %v746 = vld [vmem:[%s3 + $0xd30] sm:$0xff]
  %v747 = vld [vmem:[%s3 + $0xd38] sm:$0xff]
  %v748 = vld [vmem:[%s3 + $0xd40] sm:$0xff]
  %v749 = vld [vmem:[%s3 + $0xd48] sm:$0xff]
  %v750 = vld [vmem:[%s3 + $0xd50] sm:$0xff]
  %v751 = vld [vmem:[%s3 + $0xd58] sm:$0xff]
  %v752 = vld [vmem:[%s3 + $0xd60] sm:$0xff]
  %v753 = vld [vmem:[%s3 + $0xd68] sm:$0xff]
  %v754 = vld [vmem:[%s3 + $0xd70] sm:$0xff]
  %v755 = vld [vmem:[%s3 + $0xd78] sm:$0xff]
  %v756 = vld [vmem:[%s3 + $0xd80] sm:$0xff]
  %v757 = vld [vmem:[%s3 + $0xd88] sm:$0xff]
  %v758 = vld [vmem:[%s3 + $0xd90] sm:$0xff]
  %v759 = vld [vmem:[%s3 + $0xd98] sm:$0xff]
  %v760 = vld [vmem:[%s3 + $0xda0] sm:$0xff]
  %v761 = vld [vmem:[%s3 + $0xda8] sm:$0xff]
  %v762 = vld [vmem:[%s3 + $0xdb0] sm:$0xff]
  %v763 = vld [vmem:[%s3 + $0xdb8] sm:$0xff]
  %v764 = vld [vmem:[%s3 + $0xdc0] sm:$0xff]
  %v765 = vld [vmem:[%s3 + $0xdc8] sm:$0xff]
  %v766 = vld [vmem:[%s3 + $0xdd0] sm:$0xff]
  %v767 = vld [vmem:[%s3 + $0xdd8] sm:$0xff]
  %v768 = vld [vmem:[%s3 + $0xde0] sm:$0xff]
  %v769 = vld [vmem:[%s3 + $0xde8] sm:$0xff]
  %v770 = vld [vmem:[%s3 + $0xdf0] sm:$0xff]
  %v771 = vld [vmem:[%s3 + $0xdf8] sm:$0xff]
  %v772 = vld [vmem:[%s3 + $0xe00] sm:$0xff]
  %v773 = vld [vmem:[%s3 + $0xe08] sm:$0xff]
  %v774 = vld [vmem:[%s3 + $0xe10] sm:$0xff]
  %v775 = vld [vmem:[%s3 + $0xe18] sm:$0xff]
  %v776 = vld [vmem:[%s3 + $0xe20] sm:$0xff]
  %v777 = vld [vmem:[%s3 + $0xe28] sm:$0xff]
  %v778 = vld [vmem:[%s3 + $0xe30] sm:$0xff]
  %v779 = vld [vmem:[%s3 + $0xe38] sm:$0xff]
  %v780 = vld [vmem:[%s3 + $0xe40] sm:$0xff]
  %v781 = vld [vmem:[%s3 + $0xe48] sm:$0xff]
  %v782 = vld [vmem:[%s3 + $0xe50] sm:$0xff]
  %v783 = vld [vmem:[%s3 + $0xe58] sm:$0xff]
  %v784 = vld [vmem:[%s3 + $0xe60] sm:$0xff]
  %v785 = vld [vmem:[%s3 + $0xe68] sm:$0xff]
  %v786 = vld [vmem:[%s3 + $0xe70] sm:$0xff]
  %v787 = vld [vmem:[%s3 + $0xe78] sm:$0xff]
  %v788 = vld [vmem:[%s3 + $0xe80] sm:$0xff]
  %v789 = vld [vmem:[%s3 + $0xe88] sm:$0xff]
  %v790 = vld [vmem:[%s3 + $0xe90] sm:$0xff]
  %v791 = vld [vmem:[%s3 + $0xe98] sm:$0xff]
  %v792 = vld [vmem:[%s3 + $0xea0] sm:$0xff]
  %v793 = vld [vmem:[%s3 + $0xea8] sm:$0xff]
  %v794 = vld [vmem:[%s3 + $0xeb0] sm:$0xff]
  %v795 = vld [vmem:[%s3 + $0xeb8] sm:$0xff]
  %v796 = vld [vmem:[%s3 + $0xec0] sm:$0xff]
  %v797 = vld [vmem:[%s3 + $0xec8] sm:$0xff]
  %v798 = vld [vmem:[%s3 + $0xed0] sm:$0xff]
  %v799 = vld [vmem:[%s3 + $0xed8] sm:$0xff]
  %v800 = vld [vmem:[%s3 + $0xee0] sm:$0xff]
  %v801 = vld [vmem:[%s3 + $0xee8] sm:$0xff]
  %v802 = vld [vmem:[%s3 + $0xef0] sm:$0xff]
  %v803 = vld [vmem:[%s3 + $0xef8] sm:$0xff]
  %v804 = vld [vmem:[%s3 + $0xf00] sm:$0xff]
  %v805 = vld [vmem:[%s3 + $0xf08] sm:$0xff]
  %v806 = vld [vmem:[%s3 + $0xf10] sm:$0xff]
  %v807 = vld [vmem:[%s3 + $0xf18] sm:$0xff]
  %v808 = vld [vmem:[%s3 + $0xf20] sm:$0xff]
  %v809 = vld [vmem:[%s3 + $0xf28] sm:$0xff]
  %v810 = vld [vmem:[%s3 + $0xf30] sm:$0xff]
  %v811 = vld [vmem:[%s3 + $0xf38] sm:$0xff]
  %v812 = vld [vmem:[%s3 + $0xf40] sm:$0xff]
  %v813 = vld [vmem:[%s3 + $0xf48] sm:$0xff]
  %v814 = vld [vmem:[%s3 + $0xf50] sm:$0xff]
  %v815 = vld [vmem:[%s3 + $0xf58] sm:$0xff]
  %v816 = vld [vmem:[%s3 + $0xf60] sm:$0xff]
  %v817 = vld [vmem:[%s3 + $0xf68] sm:$0xff]
  %v818 = vld [vmem:[%s3 + $0xf70] sm:$0xff]
  %v819 = vld [vmem:[%s3 + $0xf78] sm:$0xff]
  %v820 = vld [vmem:[%s3 + $0xf80] sm:$0xff]
  %v821 = vld [vmem:[%s3 + $0xf88] sm:$0xff]
  %v822 = vld [vmem:[%s3 + $0xf90] sm:$0xff]
  %v823 = vld [vmem:[%s3 + $0xf98] sm:$0xff]
  %v824 = vld [vmem:[%s3 + $0xfa0] sm:$0xff]
  %v825 = vld [vmem:[%s3 + $0xfa8] sm:$0xff]
  %v826 = vld [vmem:[%s3 + $0xfb0] sm:$0xff]
  %v827 = vld [vmem:[%s3 + $0xfb8] sm:$0xff]
  %v828 = vld [vmem:[%s3 + $0xfc0] sm:$0xff]
  %v829 = vld [vmem:[%s3 + $0xfc8] sm:$0xff]
  %v830 = vld [vmem:[%s3 + $0xfd0] sm:$0xff]
  %v831 = vld [vmem:[%s3 + $0xfd8] sm:$0xff]
  %v832 = vld [vmem:[%s3 + $0xfe0] sm:$0xff]
  %v833 = vld [vmem:[%s3 + $0xfe8] sm:$0xff]
  %v834 = vld [vmem:[%s3 + $0xff0] sm:$0xff]
  %v835 = vld [vmem:[%s3 + $0xff8] sm:$0xff]
  %v836 = vld [vmem:[%s4] sm:$0xff]
  %v838 = vlaneseq
  %v839 = vshrl.u32 %v838, 7
  %v840 = vsub.s32 0, %v839
  %v841 = vrot.slane %v836, %v840
  %v842 = vlaneseq
  %v843 = vshrl.u32 %v842, 7
  %v844 = vsub.s32 1, %v843
  %v845 = vrot.slane %v836, %v844
  %v846 = vlaneseq
  %v847 = vshrl.u32 %v846, 7
  %v848 = vsub.s32 2, %v847
  %v849 = vrot.slane %v836, %v848
  %v850 = vlaneseq
  %v851 = vshrl.u32 %v850, 7
  %v852 = vsub.s32 3, %v851
  %v853 = vrot.slane %v836, %v852
  %v854 = vlaneseq
  %v855 = vshrl.u32 %v854, 7
  %v856 = vsub.s32 4, %v855
  %v857 = vrot.slane %v836, %v856
  %v858 = vlaneseq
  %v859 = vshrl.u32 %v858, 7
  %v860 = vsub.s32 5, %v859
  %v861 = vrot.slane %v836, %v860
  %v862 = vlaneseq
  %v863 = vshrl.u32 %v862, 7
  %v864 = vsub.s32 6, %v863
  %v865 = vrot.slane %v836, %v864
  %v866 = vlaneseq
  %v867 = vshrl.u32 %v866, 7
  %v868 = vsub.s32 7, %v867
  %v869 = vrot.slane %v836, %v868
  %878 = vmatprep.subr.mxu0 %v325
  %879 = vmatpush1.msra.mxu0 %v324
  %880 = vmatprep.subr.mxu0 %v333
  %881 = vmatpush1.msra.mxu0 %v332
  %882 = vmatprep.subr.mxu0 %v341
  %883 = vmatpush1.msra.mxu0 %v340
  %884 = vmatprep.subr.mxu0 %v349
  %885 = vmatpush1.msra.mxu0 %v348
  %886 = vmatprep.subr.mxu0 %v357
  %887 = vmatpush1.msra.mxu0 %v356
  %888 = vmatprep.subr.mxu0 %v365
  %889 = vmatpush1.msra.mxu0 %v364
  %890 = vmatprep.subr.mxu0 %v373
  %891 = vmatpush1.msra.mxu0 %v372
  %892 = vmatprep.subr.mxu0 %v381
  %893 = vmatpush1.msra.mxu0 %v380
  %894 = vmatprep.subr.mxu0 %v389
  %895 = vmatpush1.msra.mxu0 %v388
  %896 = vmatprep.subr.mxu0 %v397
  %897 = vmatpush1.msra.mxu0 %v396
  %898 = vmatprep.subr.mxu0 %v405
  %899 = vmatpush1.msra.mxu0 %v404
  %900 = vmatprep.subr.mxu0 %v413
  %901 = vmatpush1.msra.mxu0 %v412
  %902 = vmatprep.subr.mxu0 %v421
  %903 = vmatpush1.msra.mxu0 %v420
  %904 = vmatprep.subr.mxu0 %v429
  %905 = vmatpush1.msra.mxu0 %v428
  %906 = vmatprep.subr.mxu0 %v437
  %907 = vmatpush1.msra.mxu0 %v436
  %908 = vmatprep.subr.mxu0 %v445
  %909 = vmatpush1.msra.mxu0 %v444
  %910 = vmatprep.subr.mxu0 %v453
  %911 = vmatpush1.msra.mxu0 %v452
  %912 = vmatprep.subr.mxu0 %v461
  %913 = vmatpush1.msra.mxu0 %v460
  %914 = vmatprep.subr.mxu0 %v469
  %915 = vmatpush1.msra.mxu0 %v468
  %916 = vmatprep.subr.mxu0 %v477
  %917 = vmatpush1.msra.mxu0 %v476
  %918 = vmatprep.subr.mxu0 %v485
  %919 = vmatpush1.msra.mxu0 %v484
  %920 = vmatprep.subr.mxu0 %v493
  %921 = vmatpush1.msra.mxu0 %v492
  %922 = vmatprep.subr.mxu0 %v501
  %923 = vmatpush1.msra.mxu0 %v500
  %924 = vmatprep.subr.mxu0 %v509
  %925 = vmatpush1.msra.mxu0 %v508
  %926 = vmatprep.subr.mxu0 %v517
  %927 = vmatpush1.msra.mxu0 %v516
  %928 = vmatprep.subr.mxu0 %v525
  %929 = vmatpush1.msra.mxu0 %v524
  %930 = vmatprep.subr.mxu0 %v533
  %931 = vmatpush1.msra.mxu0 %v532
  %932 = vmatprep.subr.mxu0 %v541
  %933 = vmatpush1.msra.mxu0 %v540
  %934 = vmatprep.subr.mxu0 %v549
  %935 = vmatpush1.msra.mxu0 %v548
  %936 = vmatprep.subr.mxu0 %v557
  %937 = vmatpush1.msra.mxu0 %v556
  %938 = vmatprep.subr.mxu0 %v565
  %939 = vmatpush1.msra.mxu0 %v564
  %940 = vmatprep.subr.mxu0 %v573
  %941 = vmatpush1.msra.mxu0 %v572
  %942 = vmatprep.mubr.f32.mxu0 %v321
  %943 = vmatmul.mubr.f32.gmra.mrb[0].mxu0 %v320
  %v944 = vpop.f32.mrb[0].mxu0
  %v945 = vadd.f32 %v841, %v944
  %v946 = vpop.f32.mrb[0].mxu0
  %v947 = vadd.f32 %v845, %v946
  %948 = vdwg.mxu0
  %949 = vmatprep.subr.mxu0 %v581
  %950 = vmatpush1.msra.mxu0 %v580
  %951 = vmatprep.subr.mxu0 %v589
  %952 = vmatpush1.msra.mxu0 %v588
  %953 = vmatprep.subr.mxu0 %v597
  %954 = vmatpush1.msra.mxu0 %v596
  %955 = vmatprep.subr.mxu0 %v605
  %956 = vmatpush1.msra.mxu0 %v604
  %957 = vmatprep.subr.mxu0 %v613
  %958 = vmatpush1.msra.mxu0 %v612
  %959 = vmatprep.subr.mxu0 %v621
  %960 = vmatpush1.msra.mxu0 %v620
  %961 = vmatprep.subr.mxu0 %v629
  %962 = vmatpush1.msra.mxu0 %v628
  %963 = vmatprep.subr.mxu0 %v637
  %964 = vmatpush1.msra.mxu0 %v636
  %965 = vmatprep.subr.mxu0 %v645
  %966 = vmatpush1.msra.mxu0 %v644
  %967 = vmatprep.subr.mxu0 %v653
  %968 = vmatpush1.msra.mxu0 %v652
  %969 = vmatprep.subr.mxu0 %v661
  %970 = vmatpush1.msra.mxu0 %v660
  %971 = vmatprep.subr.mxu0 %v669
  %972 = vmatpush1.msra.mxu0 %v668
  %973 = vmatprep.subr.mxu0 %v677
  %974 = vmatpush1.msra.mxu0 %v676
  %975 = vmatprep.subr.mxu0 %v685
  %976 = vmatpush1.msra.mxu0 %v684
  %977 = vmatprep.subr.mxu0 %v693
  %978 = vmatpush1.msra.mxu0 %v692
  %979 = vmatprep.subr.mxu0 %v701
  %980 = vmatpush1.msra.mxu0 %v700
  %981 = vmatprep.subr.mxu0 %v709
  %982 = vmatpush1.msra.mxu0 %v708
  %983 = vmatprep.subr.mxu0 %v717
  %984 = vmatpush1.msra.mxu0 %v716
  %985 = vmatprep.subr.mxu0 %v725
  %986 = vmatpush1.msra.mxu0 %v724
  %987 = vmatprep.subr.mxu0 %v733
  %988 = vmatpush1.msra.mxu0 %v732
  %989 = vmatprep.subr.mxu0 %v741
  %990 = vmatpush1.msra.mxu0 %v740
  %991 = vmatprep.subr.mxu0 %v749
  %992 = vmatpush1.msra.mxu0 %v748
  %993 = vmatprep.subr.mxu0 %v757
  %994 = vmatpush1.msra.mxu0 %v756
  %995 = vmatprep.subr.mxu0 %v765
  %996 = vmatpush1.msra.mxu0 %v764
  %997 = vmatprep.subr.mxu0 %v773
  %998 = vmatpush1.msra.mxu0 %v772
  %999 = vmatprep.subr.mxu0 %v781
  %1000 = vmatpush1.msra.mxu0 %v780
  %1001 = vmatprep.subr.mxu0 %v789
  %1002 = vmatpush1.msra.mxu0 %v788
  %1003 = vmatprep.subr.mxu0 %v797
  %1004 = vmatpush1.msra.mxu0 %v796
  %1005 = vmatprep.subr.mxu0 %v805
  %1006 = vmatpush1.msra.mxu0 %v804
  %1007 = vmatprep.subr.mxu0 %v813
  %1008 = vmatpush1.msra.mxu0 %v812
  %1009 = vmatprep.subr.mxu0 %v821
  %1010 = vmatpush1.msra.mxu0 %v820
  %1011 = vmatprep.subr.mxu0 %v829
  %1012 = vmatpush1.msra.mxu0 %v828
  %1013 = vmatprep.mubr.f32.mxu0 %v323
  %1014 = vmatmul.mubr.f32.gmra.mrb[0].mxu0 %v322
  %v1015 = vpop.f32.mrb[0].mxu0
  %v1016 = vadd.f32 %v945, %v1015
  %v1017 = vpop.f32.mrb[0].mxu0
  %v1018 = vadd.f32 %v947, %v1017
  %1019 = vdwg.mxu0
  %1020 = vmatprep.subr.mxu0 %v327
  %1021 = vmatpush1.msra.mxu0 %v326
  %1022 = vmatprep.subr.mxu0 %v335
  %1023 = vmatpush1.msra.mxu0 %v334
  %1024 = vmatprep.subr.mxu0 %v343
  %1025 = vmatpush1.msra.mxu0 %v342
  %1026 = vmatprep.subr.mxu0 %v351
  %1027 = vmatpush1.msra.mxu0 %v350
  %1028 = vmatprep.subr.mxu0 %v359
  %1029 = vmatpush1.msra.mxu0 %v358
  %1030 = vmatprep.subr.mxu0 %v367
  %1031 = vmatpush1.msra.mxu0 %v366
  %1032 = vmatprep.subr.mxu0 %v375
  %1033 = vmatpush1.msra.mxu0 %v374
  %1034 = vmatprep.subr.mxu0 %v383
  %1035 = vmatpush1.msra.mxu0 %v382
  %1036 = vmatprep.subr.mxu0 %v391
  %1037 = vmatpush1.msra.mxu0 %v390
  %1038 = vmatprep.subr.mxu0 %v399
  %1039 = vmatpush1.msra.mxu0 %v398
  %1040 = vmatprep.subr.mxu0 %v407
  %1041 = vmatpush1.msra.mxu0 %v406
  %1042 = vmatprep.subr.mxu0 %v415
  %1043 = vmatpush1.msra.mxu0 %v414
  %1044 = vmatprep.subr.mxu0 %v423
  %1045 = vmatpush1.msra.mxu0 %v422
  %1046 = vmatprep.subr.mxu0 %v431
  %1047 = vmatpush1.msra.mxu0 %v430
  %1048 = vmatprep.subr.mxu0 %v439
  %1049 = vmatpush1.msra.mxu0 %v438
  %1050 = vmatprep.subr.mxu0 %v447
  %1051 = vmatpush1.msra.mxu0 %v446
  %1052 = vmatprep.subr.mxu0 %v455
  %1053 = vmatpush1.msra.mxu0 %v454
  %1054 = vmatprep.subr.mxu0 %v463
  %1055 = vmatpush1.msra.mxu0 %v462
  %1056 = vmatprep.subr.mxu0 %v471
  %1057 = vmatpush1.msra.mxu0 %v470
  %1058 = vmatprep.subr.mxu0 %v479
  %1059 = vmatpush1.msra.mxu0 %v478
  %1060 = vmatprep.subr.mxu0 %v487
  %1061 = vmatpush1.msra.mxu0 %v486
  %1062 = vmatprep.subr.mxu0 %v495
  %1063 = vmatpush1.msra.mxu0 %v494
  %1064 = vmatprep.subr.mxu0 %v503
  %1065 = vmatpush1.msra.mxu0 %v502
  %1066 = vmatprep.subr.mxu0 %v511
  %1067 = vmatpush1.msra.mxu0 %v510
  %1068 = vmatprep.subr.mxu0 %v519
  %1069 = vmatpush1.msra.mxu0 %v518
  %1070 = vmatprep.subr.mxu0 %v527
  %1071 = vmatpush1.msra.mxu0 %v526
  %1072 = vmatprep.subr.mxu0 %v535
  %1073 = vmatpush1.msra.mxu0 %v534
  %1074 = vmatprep.subr.mxu0 %v543
  %1075 = vmatpush1.msra.mxu0 %v542
  %1076 = vmatprep.subr.mxu0 %v551
  %1077 = vmatpush1.msra.mxu0 %v550
  %1078 = vmatprep.subr.mxu0 %v559
  %1079 = vmatpush1.msra.mxu0 %v558
  %1080 = vmatprep.subr.mxu0 %v567
  %1081 = vmatpush1.msra.mxu0 %v566
  %1082 = vmatprep.subr.mxu0 %v575
  %1083 = vmatpush1.msra.mxu0 %v574
  %1084 = vmatprep.mubr.f32.mxu0 %v321
  %1085 = vmatmul.mubr.f32.gmra.mrb[0].mxu0 %v320
  %v1086 = vpop.f32.mrb[0].mxu0
  %v1087 = vadd.f32 %v849, %v1086
  %v1088 = vpop.f32.mrb[0].mxu0
  %v1089 = vadd.f32 %v853, %v1088
  %1090 = vdwg.mxu0
  %1091 = vmatprep.subr.mxu0 %v583
  %1092 = vmatpush1.msra.mxu0 %v582
  %1093 = vmatprep.subr.mxu0 %v591
  %1094 = vmatpush1.msra.mxu0 %v590
  %1095 = vmatprep.subr.mxu0 %v599
  %1096 = vmatpush1.msra.mxu0 %v598
  %1097 = vmatprep.subr.mxu0 %v607
  %1098 = vmatpush1.msra.mxu0 %v606
  %1099 = vmatprep.subr.mxu0 %v615
  %1100 = vmatpush1.msra.mxu0 %v614
  %1101 = vmatprep.subr.mxu0 %v623
  %1102 = vmatpush1.msra.mxu0 %v622
  %1103 = vmatprep.subr.mxu0 %v631
  %1104 = vmatpush1.msra.mxu0 %v630
  %1105 = vmatprep.subr.mxu0 %v639
  %1106 = vmatpush1.msra.mxu0 %v638
  %1107 = vmatprep.subr.mxu0 %v647
  %1108 = vmatpush1.msra.mxu0 %v646
  %1109 = vmatprep.subr.mxu0 %v655
  %1110 = vmatpush1.msra.mxu0 %v654
  %1111 = vmatprep.subr.mxu0 %v663
  %1112 = vmatpush1.msra.mxu0 %v662
  %1113 = vmatprep.subr.mxu0 %v671
  %1114 = vmatpush1.msra.mxu0 %v670
  %1115 = vmatprep.subr.mxu0 %v679
  %1116 = vmatpush1.msra.mxu0 %v678
  %1117 = vmatprep.subr.mxu0 %v687
  %1118 = vmatpush1.msra.mxu0 %v686
  %1119 = vmatprep.subr.mxu0 %v695
  %1120 = vmatpush1.msra.mxu0 %v694
  %1121 = vmatprep.subr.mxu0 %v703
  %1122 = vmatpush1.msra.mxu0 %v702
  %1123 = vmatprep.subr.mxu0 %v711
  %1124 = vmatpush1.msra.mxu0 %v710
  %1125 = vmatprep.subr.mxu0 %v719
  %1126 = vmatpush1.msra.mxu0 %v718
  %1127 = vmatprep.subr.mxu0 %v727
  %1128 = vmatpush1.msra.mxu0 %v726
  %1129 = vmatprep.subr.mxu0 %v735
  %1130 = vmatpush1.msra.mxu0 %v734
  %1131 = vmatprep.subr.mxu0 %v743
  %1132 = vmatpush1.msra.mxu0 %v742
  %1133 = vmatprep.subr.mxu0 %v751
  %1134 = vmatpush1.msra.mxu0 %v750
  %1135 = vmatprep.subr.mxu0 %v759
  %1136 = vmatpush1.msra.mxu0 %v758
  %1137 = vmatprep.subr.mxu0 %v767
  %1138 = vmatpush1.msra.mxu0 %v766
  %1139 = vmatprep.subr.mxu0 %v775
  %1140 = vmatpush1.msra.mxu0 %v774
  %1141 = vmatprep.subr.mxu0 %v783
  %1142 = vmatpush1.msra.mxu0 %v782
  %1143 = vmatprep.subr.mxu0 %v791
  %1144 = vmatpush1.msra.mxu0 %v790
  %1145 = vmatprep.subr.mxu0 %v799
  %1146 = vmatpush1.msra.mxu0 %v798
  %1147 = vmatprep.subr.mxu0 %v807
  %1148 = vmatpush1.msra.mxu0 %v806
  %1149 = vmatprep.subr.mxu0 %v815
  %1150 = vmatpush1.msra.mxu0 %v814
  %1151 = vmatprep.subr.mxu0 %v823
  %1152 = vmatpush1.msra.mxu0 %v822
  %1153 = vmatprep.subr.mxu0 %v831
  %1154 = vmatpush1.msra.mxu0 %v830
  %1155 = vmatprep.mubr.f32.mxu0 %v323
  %1156 = vmatmul.mubr.f32.gmra.mrb[0].mxu0 %v322
  %v1157 = vpop.f32.mrb[0].mxu0
  %v1158 = vadd.f32 %v1087, %v1157
  %v1159 = vpop.f32.mrb[0].mxu0
  %v1160 = vadd.f32 %v1089, %v1159
  %1161 = vdwg.mxu0
  %1162 = vmatprep.subr.mxu0 %v329
  %1163 = vmatpush1.msra.mxu0 %v328
  %1164 = vmatprep.subr.mxu0 %v337
  %1165 = vmatpush1.msra.mxu0 %v336
  %1166 = vmatprep.subr.mxu0 %v345
  %1167 = vmatpush1.msra.mxu0 %v344
  %1168 = vmatprep.subr.mxu0 %v353
  %1169 = vmatpush1.msra.mxu0 %v352
  %1170 = vmatprep.subr.mxu0 %v361
  %1171 = vmatpush1.msra.mxu0 %v360
  %1172 = vmatprep.subr.mxu0 %v369
  %1173 = vmatpush1.msra.mxu0 %v368
  %1174 = vmatprep.subr.mxu0 %v377
  %1175 = vmatpush1.msra.mxu0 %v376
  %1176 = vmatprep.subr.mxu0 %v385
  %1177 = vmatpush1.msra.mxu0 %v384
  %1178 = vmatprep.subr.mxu0 %v393
  %1179 = vmatpush1.msra.mxu0 %v392
  %1180 = vmatprep.subr.mxu0 %v401
  %1181 = vmatpush1.msra.mxu0 %v400
  %1182 = vmatprep.subr.mxu0 %v409
  %1183 = vmatpush1.msra.mxu0 %v408
  %1184 = vmatprep.subr.mxu0 %v417
  %1185 = vmatpush1.msra.mxu0 %v416
  %1186 = vmatprep.subr.mxu0 %v425
  %1187 = vmatpush1.msra.mxu0 %v424
  %1188 = vmatprep.subr.mxu0 %v433
  %1189 = vmatpush1.msra.mxu0 %v432
  %1190 = vmatprep.subr.mxu0 %v441
  %1191 = vmatpush1.msra.mxu0 %v440
  %1192 = vmatprep.subr.mxu0 %v449
  %1193 = vmatpush1.msra.mxu0 %v448
  %1194 = vmatprep.subr.mxu0 %v457
  %1195 = vmatpush1.msra.mxu0 %v456
  %1196 = vmatprep.subr.mxu0 %v465
  %1197 = vmatpush1.msra.mxu0 %v464
  %1198 = vmatprep.subr.mxu0 %v473
  %1199 = vmatpush1.msra.mxu0 %v472
  %1200 = vmatprep.subr.mxu0 %v481
  %1201 = vmatpush1.msra.mxu0 %v480
  %1202 = vmatprep.subr.mxu0 %v489
  %1203 = vmatpush1.msra.mxu0 %v488
  %1204 = vmatprep.subr.mxu0 %v497
  %1205 = vmatpush1.msra.mxu0 %v496
  %1206 = vmatprep.subr.mxu0 %v505
  %1207 = vmatpush1.msra.mxu0 %v504
  %1208 = vmatprep.subr.mxu0 %v513
  %1209 = vmatpush1.msra.mxu0 %v512
  %1210 = vmatprep.subr.mxu0 %v521
  %1211 = vmatpush1.msra.mxu0 %v520
  %1212 = vmatprep.subr.mxu0 %v529
  %1213 = vmatpush1.msra.mxu0 %v528
  %1214 = vmatprep.subr.mxu0 %v537
  %1215 = vmatpush1.msra.mxu0 %v536
  %1216 = vmatprep.subr.mxu0 %v545
  %1217 = vmatpush1.msra.mxu0 %v544
  %1218 = vmatprep.subr.mxu0 %v553
  %1219 = vmatpush1.msra.mxu0 %v552
  %1220 = vmatprep.subr.mxu0 %v561
  %1221 = vmatpush1.msra.mxu0 %v560
  %1222 = vmatprep.subr.mxu0 %v569
  %1223 = vmatpush1.msra.mxu0 %v568
  %1224 = vmatprep.subr.mxu0 %v577
  %1225 = vmatpush1.msra.mxu0 %v576
  %1226 = vmatprep.mubr.f32.mxu0 %v321
  %1227 = vmatmul.mubr.f32.gmra.mrb[0].mxu0 %v320
  %v1228 = vpop.f32.mrb[0].mxu0
  %v1229 = vadd.f32 %v857, %v1228
  %v1230 = vpop.f32.mrb[0].mxu0
  %v1231 = vadd.f32 %v861, %v1230
  %1232 = vdwg.mxu0
  %1233 = vmatprep.subr.mxu0 %v585
  %1234 = vmatpush1.msra.mxu0 %v584
  %1235 = vmatprep.subr.mxu0 %v593
  %1236 = vmatpush1.msra.mxu0 %v592
  %1237 = vmatprep.subr.mxu0 %v601
  %1238 = vmatpush1.msra.mxu0 %v600
  %1239 = vmatprep.subr.mxu0 %v609
  %1240 = vmatpush1.msra.mxu0 %v608
  %1241 = vmatprep.subr.mxu0 %v617
  %1242 = vmatpush1.msra.mxu0 %v616
  %1243 = vmatprep.subr.mxu0 %v625
  %1244 = vmatpush1.msra.mxu0 %v624
  %1245 = vmatprep.subr.mxu0 %v633
  %1246 = vmatpush1.msra.mxu0 %v632
  %1247 = vmatprep.subr.mxu0 %v641
  %1248 = vmatpush1.msra.mxu0 %v640
  %1249 = vmatprep.subr.mxu0 %v649
  %1250 = vmatpush1.msra.mxu0 %v648
  %1251 = vmatprep.subr.mxu0 %v657
  %1252 = vmatpush1.msra.mxu0 %v656
  %1253 = vmatprep.subr.mxu0 %v665
  %1254 = vmatpush1.msra.mxu0 %v664
  %1255 = vmatprep.subr.mxu0 %v673
  %1256 = vmatpush1.msra.mxu0 %v672
  %1257 = vmatprep.subr.mxu0 %v681
  %1258 = vmatpush1.msra.mxu0 %v680
  %1259 = vmatprep.subr.mxu0 %v689
  %1260 = vmatpush1.msra.mxu0 %v688
  %1261 = vmatprep.subr.mxu0 %v697
  %1262 = vmatpush1.msra.mxu0 %v696
  %1263 = vmatprep.subr.mxu0 %v705
  %1264 = vmatpush1.msra.mxu0 %v704
  %1265 = vmatprep.subr.mxu0 %v713
  %1266 = vmatpush1.msra.mxu0 %v712
  %1267 = vmatprep.subr.mxu0 %v721
  %1268 = vmatpush1.msra.mxu0 %v720
  %1269 = vmatprep.subr.mxu0 %v729
  %1270 = vmatpush1.msra.mxu0 %v728
  %1271 = vmatprep.subr.mxu0 %v737
  %1272 = vmatpush1.msra.mxu0 %v736
  %1273 = vmatprep.subr.mxu0 %v745
  %1274 = vmatpush1.msra.mxu0 %v744
  %1275 = vmatprep.subr.mxu0 %v753
  %1276 = vmatpush1.msra.mxu0 %v752
  %1277 = vmatprep.subr.mxu0 %v761
  %1278 = vmatpush1.msra.mxu0 %v760
  %1279 = vmatprep.subr.mxu0 %v769
  %1280 = vmatpush1.msra.mxu0 %v768
  %1281 = vmatprep.subr.mxu0 %v777
  %1282 = vmatpush1.msra.mxu0 %v776
  %1283 = vmatprep.subr.mxu0 %v785
  %1284 = vmatpush1.msra.mxu0 %v784
  %1285 = vmatprep.subr.mxu0 %v793
  %1286 = vmatpush1.msra.mxu0 %v792
  %1287 = vmatprep.subr.mxu0 %v801
  %1288 = vmatpush1.msra.mxu0 %v800
  %1289 = vmatprep.subr.mxu0 %v809
  %1290 = vmatpush1.msra.mxu0 %v808
  %1291 = vmatprep.subr.mxu0 %v817
  %1292 = vmatpush1.msra.mxu0 %v816
  %1293 = vmatprep.subr.mxu0 %v825
  %1294 = vmatpush1.msra.mxu0 %v824
  %1295 = vmatprep.subr.mxu0 %v833
  %1296 = vmatpush1.msra.mxu0 %v832
  %1297 = vmatprep.mubr.f32.mxu0 %v323
  %1298 = vmatmul.mubr.f32.gmra.mrb[0].mxu0 %v322
  %v1299 = vpop.f32.mrb[0].mxu0
  %v1300 = vadd.f32 %v1229, %v1299
  %v1301 = vpop.f32.mrb[0].mxu0
  %v1302 = vadd.f32 %v1231, %v1301
  %1303 = vdwg.mxu0
  %1304 = vmatprep.subr.mxu0 %v331
  %1305 = vmatpush1.msra.mxu0 %v330
  %1306 = vmatprep.subr.mxu0 %v339
  %1307 = vmatpush1.msra.mxu0 %v338
  %1308 = vmatprep.subr.mxu0 %v347
  %1309 = vmatpush1.msra.mxu0 %v346
  %1310 = vmatprep.subr.mxu0 %v355
  %1311 = vmatpush1.msra.mxu0 %v354
  %1312 = vmatprep.subr.mxu0 %v363
  %1313 = vmatpush1.msra.mxu0 %v362
  %1314 = vmatprep.subr.mxu0 %v371
  %1315 = vmatpush1.msra.mxu0 %v370
  %1316 = vmatprep.subr.mxu0 %v379
  %1317 = vmatpush1.msra.mxu0 %v378
  %1318 = vmatprep.subr.mxu0 %v387
  %1319 = vmatpush1.msra.mxu0 %v386
  %1320 = vmatprep.subr.mxu0 %v395
  %1321 = vmatpush1.msra.mxu0 %v394
  %1322 = vmatprep.subr.mxu0 %v403
  %1323 = vmatpush1.msra.mxu0 %v402
  %1324 = vmatprep.subr.mxu0 %v411
  %1325 = vmatpush1.msra.mxu0 %v410
  %1326 = vmatprep.subr.mxu0 %v419
  %1327 = vmatpush1.msra.mxu0 %v418
  %1328 = vmatprep.subr.mxu0 %v427
  %1329 = vmatpush1.msra.mxu0 %v426
  %1330 = vmatprep.subr.mxu0 %v435
  %1331 = vmatpush1.msra.mxu0 %v434
  %1332 = vmatprep.subr.mxu0 %v443
  %1333 = vmatpush1.msra.mxu0 %v442
  %1334 = vmatprep.subr.mxu0 %v451
  %1335 = vmatpush1.msra.mxu0 %v450
  %1336 = vmatprep.subr.mxu0 %v459
  %1337 = vmatpush1.msra.mxu0 %v458
  %1338 = vmatprep.subr.mxu0 %v467
  %1339 = vmatpush1.msra.mxu0 %v466
  %1340 = vmatprep.subr.mxu0 %v475
  %1341 = vmatpush1.msra.mxu0 %v474
  %1342 = vmatprep.subr.mxu0 %v483
  %1343 = vmatpush1.msra.mxu0 %v482
  %1344 = vmatprep.subr.mxu0 %v491
  %1345 = vmatpush1.msra.mxu0 %v490
  %1346 = vmatprep.subr.mxu0 %v499
  %1347 = vmatpush1.msra.mxu0 %v498
  %1348 = vmatprep.subr.mxu0 %v507
  %1349 = vmatpush1.msra.mxu0 %v506
  %1350 = vmatprep.subr.mxu0 %v515
  %1351 = vmatpush1.msra.mxu0 %v514
  %1352 = vmatprep.subr.mxu0 %v523
  %1353 = vmatpush1.msra.mxu0 %v522
  %1354 = vmatprep.subr.mxu0 %v531
  %1355 = vmatpush1.msra.mxu0 %v530
  %1356 = vmatprep.subr.mxu0 %v539
  %1357 = vmatpush1.msra.mxu0 %v538
  %1358 = vmatprep.subr.mxu0 %v547
  %1359 = vmatpush1.msra.mxu0 %v546
  %1360 = vmatprep.subr.mxu0 %v555
  %1361 = vmatpush1.msra.mxu0 %v554
  %1362 = vmatprep.subr.mxu0 %v563
  %1363 = vmatpush1.msra.mxu0 %v562
  %1364 = vmatprep.subr.mxu0 %v571
  %1365 = vmatpush1.msra.mxu0 %v570
  %1366 = vmatprep.subr.mxu0 %v579
  %1367 = vmatpush1.msra.mxu0 %v578
  %1368 = vmatprep.mubr.f32.mxu0 %v321
  %1369 = vmatmul.mubr.f32.gmra.mrb[0].mxu0 %v320
  %v1370 = vpop.f32.mrb[0].mxu0
  %v1371 = vadd.f32 %v865, %v1370
  %v1372 = vpop.f32.mrb[0].mxu0
  %v1373 = vadd.f32 %v869, %v1372
  %1374 = vdwg.mxu0
  %1375 = vmatprep.subr.mxu0 %v587
  %1376 = vmatpush1.msra.mxu0 %v586
  %1377 = vmatprep.subr.mxu0 %v595
  %1378 = vmatpush1.msra.mxu0 %v594
  %1379 = vmatprep.subr.mxu0 %v603
  %1380 = vmatpush1.msra.mxu0 %v602
  %1381 = vmatprep.subr.mxu0 %v611
  %1382 = vmatpush1.msra.mxu0 %v610
  %1383 = vmatprep.subr.mxu0 %v619
  %1384 = vmatpush1.msra.mxu0 %v618
  %1385 = vmatprep.subr.mxu0 %v627
  %1386 = vmatpush1.msra.mxu0 %v626
  %1387 = vmatprep.subr.mxu0 %v635
  %1388 = vmatpush1.msra.mxu0 %v634
  %1389 = vmatprep.subr.mxu0 %v643
  %1390 = vmatpush1.msra.mxu0 %v642
  %1391 = vmatprep.subr.mxu0 %v651
  %1392 = vmatpush1.msra.mxu0 %v650
  %1393 = vmatprep.subr.mxu0 %v659
  %1394 = vmatpush1.msra.mxu0 %v658
  %1395 = vmatprep.subr.mxu0 %v667
  %1396 = vmatpush1.msra.mxu0 %v666
  %1397 = vmatprep.subr.mxu0 %v675
  %1398 = vmatpush1.msra.mxu0 %v674
  %1399 = vmatprep.subr.mxu0 %v683
  %1400 = vmatpush1.msra.mxu0 %v682
  %1401 = vmatprep.subr.mxu0 %v691
  %1402 = vmatpush1.msra.mxu0 %v690
  %1403 = vmatprep.subr.mxu0 %v699
  %1404 = vmatpush1.msra.mxu0 %v698
  %1405 = vmatprep.subr.mxu0 %v707
  %1406 = vmatpush1.msra.mxu0 %v706
  %1407 = vmatprep.subr.mxu0 %v715
  %1408 = vmatpush1.msra.mxu0 %v714
  %1409 = vmatprep.subr.mxu0 %v723
  %1410 = vmatpush1.msra.mxu0 %v722
  %1411 = vmatprep.subr.mxu0 %v731
  %1412 = vmatpush1.msra.mxu0 %v730
  %1413 = vmatprep.subr.mxu0 %v739
  %1414 = vmatpush1.msra.mxu0 %v738
  %1415 = vmatprep.subr.mxu0 %v747
  %1416 = vmatpush1.msra.mxu0 %v746
  %1417 = vmatprep.subr.mxu0 %v755
  %1418 = vmatpush1.msra.mxu0 %v754
  %1419 = vmatprep.subr.mxu0 %v763
  %1420 = vmatpush1.msra.mxu0 %v762
  %1421 = vmatprep.subr.mxu0 %v771
  %1422 = vmatpush1.msra.mxu0 %v770
  %1423 = vmatprep.subr.mxu0 %v779
  %1424 = vmatpush1.msra.mxu0 %v778
  %1425 = vmatprep.subr.mxu0 %v787
  %1426 = vmatpush1.msra.mxu0 %v786
  %1427 = vmatprep.subr.mxu0 %v795
  %1428 = vmatpush1.msra.mxu0 %v794
  %1429 = vmatprep.subr.mxu0 %v803
  %1430 = vmatpush1.msra.mxu0 %v802
  %1431 = vmatprep.subr.mxu0 %v811
  %1432 = vmatpush1.msra.mxu0 %v810
  %1433 = vmatprep.subr.mxu0 %v819
  %1434 = vmatpush1.msra.mxu0 %v818
  %1435 = vmatprep.subr.mxu0 %v827
  %1436 = vmatpush1.msra.mxu0 %v826
  %1437 = vmatprep.subr.mxu0 %v835
  %1438 = vmatpush1.msra.mxu0 %v834
  %1439 = vmatprep.mubr.f32.mxu0 %v323
  %1440 = vmatmul.mubr.f32.gmra.mrb[0].mxu0 %v322
  %v1441 = vpop.f32.mrb[0].mxu0
  %v1442 = vadd.f32 %v1371, %v1441
  %v1443 = vpop.f32.mrb[0].mxu0
  %v1444 = vadd.f32 %v1373, %v1443
  %1445 = vdwg.mxu0
  %v1446 = vmax.f32 %v1016, 0.0
  %v1447 = vmax.f32 %v1018, 0.0
  %v1448 = vmax.f32 %v1158, 0.0
  %v1449 = vmax.f32 %v1160, 0.0
  %v1450 = vmax.f32 %v1300, 0.0
  %v1451 = vmax.f32 %v1302, 0.0
  %v1452 = vmax.f32 %v1442, 0.0
  %v1453 = vmax.f32 %v1444, 0.0
  %v1454 = vld [vmem:[%s5] sm:$0xff]
  %v1455 = vld [vmem:[%s5 + $0x8] sm:$0xff]
  %v1456 = vld [vmem:[%s5 + $0x10] sm:$0xff]
  %v1457 = vld [vmem:[%s5 + $0x18] sm:$0xff]
  %v1458 = vld [vmem:[%s5 + $0x20] sm:$0xff]
  %v1459 = vld [vmem:[%s5 + $0x28] sm:$0xff]
  %v1460 = vld [vmem:[%s5 + $0x30] sm:$0xff]
  %v1461 = vld [vmem:[%s5 + $0x38] sm:$0xff]
  %v1462 = vld [vmem:[%s5 + $0x40] sm:$0xff]
  %v1463 = vld [vmem:[%s5 + $0x48] sm:$0xff]
  %v1464 = vld [vmem:[%s5 + $0x50] sm:$0xff]
  %v1465 = vld [vmem:[%s5 + $0x58] sm:$0xff]
  %v1466 = vld [vmem:[%s5 + $0x60] sm:$0xff]
  %v1467 = vld [vmem:[%s5 + $0x68] sm:$0xff]
  %v1468 = vld [vmem:[%s5 + $0x70] sm:$0xff]
  %v1469 = vld [vmem:[%s5 + $0x78] sm:$0xff]
  %v1470 = vld [vmem:[%s5 + $0x80] sm:$0xff]
  %v1471 = vld [vmem:[%s5 + $0x88] sm:$0xff]
  %v1472 = vld [vmem:[%s5 + $0x90] sm:$0xff]
  %v1473 = vld [vmem:[%s5 + $0x98] sm:$0xff]
  %v1474 = vld [vmem:[%s5 + $0xa0] sm:$0xff]
  %v1475 = vld [vmem:[%s5 + $0xa8] sm:$0xff]
  %v1476 = vld [vmem:[%s5 + $0xb0] sm:$0xff]
  %v1477 = vld [vmem:[%s5 + $0xb8] sm:$0xff]
  %v1478 = vld [vmem:[%s5 + $0xc0] sm:$0xff]
  %v1479 = vld [vmem:[%s5 + $0xc8] sm:$0xff]
  %v1480 = vld [vmem:[%s5 + $0xd0] sm:$0xff]
  %v1481 = vld [vmem:[%s5 + $0xd8] sm:$0xff]
  %v1482 = vld [vmem:[%s5 + $0xe0] sm:$0xff]
  %v1483 = vld [vmem:[%s5 + $0xe8] sm:$0xff]
  %v1484 = vld [vmem:[%s5 + $0xf0] sm:$0xff]
  %v1485 = vld [vmem:[%s5 + $0xf8] sm:$0xff]
  %v1486 = vld [vmem:[%s5 + $0x100] sm:$0xff]
  %v1487 = vld [vmem:[%s5 + $0x108] sm:$0xff]
  %v1488 = vld [vmem:[%s5 + $0x110] sm:$0xff]
  %v1489 = vld [vmem:[%s5 + $0x118] sm:$0xff]
  %v1490 = vld [vmem:[%s5 + $0x120] sm:$0xff]
  %v1491 = vld [vmem:[%s5 + $0x128] sm:$0xff]
  %v1492 = vld [vmem:[%s5 + $0x130] sm:$0xff]
  %v1493 = vld [vmem:[%s5 + $0x138] sm:$0xff]
  %v1494 = vld [vmem:[%s5 + $0x140] sm:$0xff]
  %v1495 = vld [vmem:[%s5 + $0x148] sm:$0xff]
  %v1496 = vld [vmem:[%s5 + $0x150] sm:$0xff]
  %v1497 = vld [vmem:[%s5 + $0x158] sm:$0xff]
  %v1498 = vld [vmem:[%s5 + $0x160] sm:$0xff]
  %v1499 = vld [vmem:[%s5 + $0x168] sm:$0xff]
  %v1500 = vld [vmem:[%s5 + $0x170] sm:$0xff]
  %v1501 = vld [vmem:[%s5 + $0x178] sm:$0xff]
  %v1502 = vld [vmem:[%s5 + $0x180] sm:$0xff]
  %v1503 = vld [vmem:[%s5 + $0x188] sm:$0xff]
  %v1504 = vld [vmem:[%s5 + $0x190] sm:$0xff]
  %v1505 = vld [vmem:[%s5 + $0x198] sm:$0xff]
  %v1506 = vld [vmem:[%s5 + $0x1a0] sm:$0xff]
  %v1507 = vld [vmem:[%s5 + $0x1a8] sm:$0xff]
  %v1508 = vld [vmem:[%s5 + $0x1b0] sm:$0xff]
  %v1509 = vld [vmem:[%s5 + $0x1b8] sm:$0xff]
  %v1510 = vld [vmem:[%s5 + $0x1c0] sm:$0xff]
  %v1511 = vld [vmem:[%s5 + $0x1c8] sm:$0xff]
  %v1512 = vld [vmem:[%s5 + $0x1d0] sm:$0xff]
  %v1513 = vld [vmem:[%s5 + $0x1d8] sm:$0xff]
  %v1514 = vld [vmem:[%s5 + $0x1e0] sm:$0xff]
  %v1515 = vld [vmem:[%s5 + $0x1e8] sm:$0xff]
  %v1516 = vld [vmem:[%s5 + $0x1f0] sm:$0xff]
  %v1517 = vld [vmem:[%s5 + $0x1f8] sm:$0xff]
  %v1518 = vld [vmem:[%s5 + $0x200] sm:$0xff]
  %v1519 = vld [vmem:[%s5 + $0x208] sm:$0xff]
  %v1520 = vld [vmem:[%s5 + $0x210] sm:$0xff]
  %v1521 = vld [vmem:[%s5 + $0x218] sm:$0xff]
  %v1522 = vld [vmem:[%s5 + $0x220] sm:$0xff]
  %v1523 = vld [vmem:[%s5 + $0x228] sm:$0xff]
  %v1524 = vld [vmem:[%s5 + $0x230] sm:$0xff]
  %v1525 = vld [vmem:[%s5 + $0x238] sm:$0xff]
  %v1526 = vld [vmem:[%s5 + $0x240] sm:$0xff]
  %v1527 = vld [vmem:[%s5 + $0x248] sm:$0xff]
  %v1528 = vld [vmem:[%s5 + $0x250] sm:$0xff]
  %v1529 = vld [vmem:[%s5 + $0x258] sm:$0xff]
  %v1530 = vld [vmem:[%s5 + $0x260] sm:$0xff]
  %v1531 = vld [vmem:[%s5 + $0x268] sm:$0xff]
  %v1532 = vld [vmem:[%s5 + $0x270] sm:$0xff]
  %v1533 = vld [vmem:[%s5 + $0x278] sm:$0xff]
  %v1534 = vld [vmem:[%s5 + $0x280] sm:$0xff]
  %v1535 = vld [vmem:[%s5 + $0x288] sm:$0xff]
  %v1536 = vld [vmem:[%s5 + $0x290] sm:$0xff]
  %v1537 = vld [vmem:[%s5 + $0x298] sm:$0xff]
  %v1538 = vld [vmem:[%s5 + $0x2a0] sm:$0xff]
  %v1539 = vld [vmem:[%s5 + $0x2a8] sm:$0xff]
  %v1540 = vld [vmem:[%s5 + $0x2b0] sm:$0xff]
  %v1541 = vld [vmem:[%s5 + $0x2b8] sm:$0xff]
  %v1542 = vld [vmem:[%s5 + $0x2c0] sm:$0xff]
  %v1543 = vld [vmem:[%s5 + $0x2c8] sm:$0xff]
  %v1544 = vld [vmem:[%s5 + $0x2d0] sm:$0xff]
  %v1545 = vld [vmem:[%s5 + $0x2d8] sm:$0xff]
  %v1546 = vld [vmem:[%s5 + $0x2e0] sm:$0xff]
  %v1547 = vld [vmem:[%s5 + $0x2e8] sm:$0xff]
  %v1548 = vld [vmem:[%s5 + $0x2f0] sm:$0xff]
  %v1549 = vld [vmem:[%s5 + $0x2f8] sm:$0xff]
  %v1550 = vld [vmem:[%s5 + $0x300] sm:$0xff]
  %v1551 = vld [vmem:[%s5 + $0x308] sm:$0xff]
  %v1552 = vld [vmem:[%s5 + $0x310] sm:$0xff]
  %v1553 = vld [vmem:[%s5 + $0x318] sm:$0xff]
  %v1554 = vld [vmem:[%s5 + $0x320] sm:$0xff]
  %v1555 = vld [vmem:[%s5 + $0x328] sm:$0xff]
  %v1556 = vld [vmem:[%s5 + $0x330] sm:$0xff]
  %v1557 = vld [vmem:[%s5 + $0x338] sm:$0xff]
  %v1558 = vld [vmem:[%s5 + $0x340] sm:$0xff]
  %v1559 = vld [vmem:[%s5 + $0x348] sm:$0xff]
  %v1560 = vld [vmem:[%s5 + $0x350] sm:$0xff]
  %v1561 = vld [vmem:[%s5 + $0x358] sm:$0xff]
  %v1562 = vld [vmem:[%s5 + $0x360] sm:$0xff]
  %v1563 = vld [vmem:[%s5 + $0x368] sm:$0xff]
  %v1564 = vld [vmem:[%s5 + $0x370] sm:$0xff]
  %v1565 = vld [vmem:[%s5 + $0x378] sm:$0xff]
  %v1566 = vld [vmem:[%s5 + $0x380] sm:$0xff]
  %v1567 = vld [vmem:[%s5 + $0x388] sm:$0xff]
  %v1568 = vld [vmem:[%s5 + $0x390] sm:$0xff]
  %v1569 = vld [vmem:[%s5 + $0x398] sm:$0xff]
  %v1570 = vld [vmem:[%s5 + $0x3a0] sm:$0xff]
  %v1571 = vld [vmem:[%s5 + $0x3a8] sm:$0xff]
  %v1572 = vld [vmem:[%s5 + $0x3b0] sm:$0xff]
  %v1573 = vld [vmem:[%s5 + $0x3b8] sm:$0xff]
  %v1574 = vld [vmem:[%s5 + $0x3c0] sm:$0xff]
  %v1575 = vld [vmem:[%s5 + $0x3c8] sm:$0xff]
  %v1576 = vld [vmem:[%s5 + $0x3d0] sm:$0xff]
  %v1577 = vld [vmem:[%s5 + $0x3d8] sm:$0xff]
  %v1578 = vld [vmem:[%s5 + $0x3e0] sm:$0xff]
  %v1579 = vld [vmem:[%s5 + $0x3e8] sm:$0xff]
  %v1580 = vld [vmem:[%s5 + $0x3f0] sm:$0xff]
  %v1581 = vld [vmem:[%s5 + $0x3f8] sm:$0xff]
  %v1582 = vld [vmem:[%s6] sm:$0x1]
  %v1584 = vlaneseq
  %v1585 = vshrl.u32 %v1584, 7
  %v1586 = vsub.s32 0, %v1585
  %v1587 = vrot.slane %v1582, %v1586
  %1589 = vmatprep.subr.mxu0 0.0
  %1590 = vmatpush1.msra.mxu0 %v1454
  %1591 = vmatprep.subr.mxu0 0.0
  %1592 = vmatpush1.msra.mxu0 %v1455
  %1593 = vmatprep.subr.mxu0 0.0
  %1594 = vmatpush1.msra.mxu0 %v1456
  %1595 = vmatprep.subr.mxu0 0.0
  %1596 = vmatpush1.msra.mxu0 %v1457
  %1597 = vmatprep.subr.mxu0 0.0
  %1598 = vmatpush1.msra.mxu0 %v1458
  %1599 = vmatprep.subr.mxu0 0.0
  %1600 = vmatpush1.msra.mxu0 %v1459
  %1601 = vmatprep.subr.mxu0 0.0
  %1602 = vmatpush1.msra.mxu0 %v1460
  %1603 = vmatprep.subr.mxu0 0.0
  %1604 = vmatpush1.msra.mxu0 %v1461
  %1605 = vmatprep.subr.mxu0 0.0
  %1606 = vmatpush1.msra.mxu0 %v1462
  %1607 = vmatprep.subr.mxu0 0.0
  %1608 = vmatpush1.msra.mxu0 %v1463
  %1609 = vmatprep.subr.mxu0 0.0
  %1610 = vmatpush1.msra.mxu0 %v1464
  %1611 = vmatprep.subr.mxu0 0.0
  %1612 = vmatpush1.msra.mxu0 %v1465
  %1613 = vmatprep.subr.mxu0 0.0
  %1614 = vmatpush1.msra.mxu0 %v1466
  %1615 = vmatprep.subr.mxu0 0.0
  %1616 = vmatpush1.msra.mxu0 %v1467
  %1617 = vmatprep.subr.mxu0 0.0
  %1618 = vmatpush1.msra.mxu0 %v1468
  %1619 = vmatprep.subr.mxu0 0.0
  %1620 = vmatpush1.msra.mxu0 %v1469
  %1621 = vmatprep.subr.mxu0 0.0
  %1622 = vmatpush1.msra.mxu0 %v1470
  %1623 = vmatprep.subr.mxu0 0.0
  %1624 = vmatpush1.msra.mxu0 %v1471
  %1625 = vmatprep.subr.mxu0 0.0
  %1626 = vmatpush1.msra.mxu0 %v1472
  %1627 = vmatprep.subr.mxu0 0.0
  %1628 = vmatpush1.msra.mxu0 %v1473
  %1629 = vmatprep.subr.mxu0 0.0
  %1630 = vmatpush1.msra.mxu0 %v1474
  %1631 = vmatprep.subr.mxu0 0.0
  %1632 = vmatpush1.msra.mxu0 %v1475
  %1633 = vmatprep.subr.mxu0 0.0
  %1634 = vmatpush1.msra.mxu0 %v1476
  %1635 = vmatprep.subr.mxu0 0.0
  %1636 = vmatpush1.msra.mxu0 %v1477
  %1637 = vmatprep.subr.mxu0 0.0
  %1638 = vmatpush1.msra.mxu0 %v1478
  %1639 = vmatprep.subr.mxu0 0.0
  %1640 = vmatpush1.msra.mxu0 %v1479
  %1641 = vmatprep.subr.mxu0 0.0
  %1642 = vmatpush1.msra.mxu0 %v1480
  %1643 = vmatprep.subr.mxu0 0.0
  %1644 = vmatpush1.msra.mxu0 %v1481
  %1645 = vmatprep.subr.mxu0 0.0
  %1646 = vmatpush1.msra.mxu0 %v1482
  %1647 = vmatprep.subr.mxu0 0.0
  %1648 = vmatpush1.msra.mxu0 %v1483
  %1649 = vmatprep.subr.mxu0 0.0
  %1650 = vmatpush1.msra.mxu0 %v1484
  %1651 = vmatprep.subr.mxu0 0.0
  %1652 = vmatpush1.msra.mxu0 %v1485
  %1653 = vmatprep.mubr.f32.mxu0 %v1447
  %1654 = vmatmul.mubr.f32.gmra.mrb[0].mxu0 %v1446
  %v1655 = vpop.f32.mrb[0].mxu0
  %v1656 = vadd.f32 %v1587, %v1655
  %v1657 = vpop.f32.mrb[0].mxu0
  %1658 = vdwg.mxu0
  %1659 = vmatprep.subr.mxu0 0.0
  %1660 = vmatpush1.msra.mxu0 %v1486
  %1661 = vmatprep.subr.mxu0 0.0
  %1662 = vmatpush1.msra.mxu0 %v1487
  %1663 = vmatprep.subr.mxu0 0.0
  %1664 = vmatpush1.msra.mxu0 %v1488
  %1665 = vmatprep.subr.mxu0 0.0
  %1666 = vmatpush1.msra.mxu0 %v1489
  %1667 = vmatprep.subr.mxu0 0.0
  %1668 = vmatpush1.msra.mxu0 %v1490
  %1669 = vmatprep.subr.mxu0 0.0
  %1670 = vmatpush1.msra.mxu0 %v1491
  %1671 = vmatprep.subr.mxu0 0.0
  %1672 = vmatpush1.msra.mxu0 %v1492
  %1673 = vmatprep.subr.mxu0 0.0
  %1674 = vmatpush1.msra.mxu0 %v1493
  %1675 = vmatprep.subr.mxu0 0.0
  %1676 = vmatpush1.msra.mxu0 %v1494
  %1677 = vmatprep.subr.mxu0 0.0
  %1678 = vmatpush1.msra.mxu0 %v1495
  %1679 = vmatprep.subr.mxu0 0.0
  %1680 = vmatpush1.msra.mxu0 %v1496
  %1681 = vmatprep.subr.mxu0 0.0
  %1682 = vmatpush1.msra.mxu0 %v1497
  %1683 = vmatprep.subr.mxu0 0.0
  %1684 = vmatpush1.msra.mxu0 %v1498
  %1685 = vmatprep.subr.mxu0 0.0
  %1686 = vmatpush1.msra.mxu0 %v1499
  %1687 = vmatprep.subr.mxu0 0.0
  %1688 = vmatpush1.msra.mxu0 %v1500
  %1689 = vmatprep.subr.mxu0 0.0
  %1690 = vmatpush1.msra.mxu0 %v1501
  %1691 = vmatprep.subr.mxu0 0.0
  %1692 = vmatpush1.msra.mxu0 %v1502
  %1693 = vmatprep.subr.mxu0 0.0
  %1694 = vmatpush1.msra.mxu0 %v1503
  %1695 = vmatprep.subr.mxu0 0.0
  %1696 = vmatpush1.msra.mxu0 %v1504
  %1697 = vmatprep.subr.mxu0 0.0
  %1698 = vmatpush1.msra.mxu0 %v1505
  %1699 = vmatprep.subr.mxu0 0.0
  %1700 = vmatpush1.msra.mxu0 %v1506
  %1701 = vmatprep.subr.mxu0 0.0
  %1702 = vmatpush1.msra.mxu0 %v1507
  %1703 = vmatprep.subr.mxu0 0.0
  %1704 = vmatpush1.msra.mxu0 %v1508
  %1705 = vmatprep.subr.mxu0 0.0
  %1706 = vmatpush1.msra.mxu0 %v1509
  %1707 = vmatprep.subr.mxu0 0.0
  %1708 = vmatpush1.msra.mxu0 %v1510
  %1709 = vmatprep.subr.mxu0 0.0
  %1710 = vmatpush1.msra.mxu0 %v1511
  %1711 = vmatprep.subr.mxu0 0.0
  %1712 = vmatpush1.msra.mxu0 %v1512
  %1713 = vmatprep.subr.mxu0 0.0
  %1714 = vmatpush1.msra.mxu0 %v1513
  %1715 = vmatprep.subr.mxu0 0.0
  %1716 = vmatpush1.msra.mxu0 %v1514
  %1717 = vmatprep.subr.mxu0 0.0
  %1718 = vmatpush1.msra.mxu0 %v1515
  %1719 = vmatprep.subr.mxu0 0.0
  %1720 = vmatpush1.msra.mxu0 %v1516
  %1721 = vmatprep.subr.mxu0 0.0
  %1722 = vmatpush1.msra.mxu0 %v1517
  %1723 = vmatprep.mubr.f32.mxu0 %v1449
  %1724 = vmatmul.mubr.f32.gmra.mrb[0].mxu0 %v1448
  %v1725 = vpop.f32.mrb[0].mxu0
  %v1726 = vadd.f32 %v1656, %v1725
  %v1727 = vpop.f32.mrb[0].mxu0
  %1728 = vdwg.mxu0
  %1729 = vmatprep.subr.mxu0 0.0
  %1730 = vmatpush1.msra.mxu0 %v1518
  %1731 = vmatprep.subr.mxu0 0.0
  %1732 = vmatpush1.msra.mxu0 %v1519
  %1733 = vmatprep.subr.mxu0 0.0
  %1734 = vmatpush1.msra.mxu0 %v1520
  %1735 = vmatprep.subr.mxu0 0.0
  %1736 = vmatpush1.msra.mxu0 %v1521
  %1737 = vmatprep.subr.mxu0 0.0
  %1738 = vmatpush1.msra.mxu0 %v1522
  %1739 = vmatprep.subr.mxu0 0.0
  %1740 = vmatpush1.msra.mxu0 %v1523
  %1741 = vmatprep.subr.mxu0 0.0
  %1742 = vmatpush1.msra.mxu0 %v1524
  %1743 = vmatprep.subr.mxu0 0.0
  %1744 = vmatpush1.msra.mxu0 %v1525
  %1745 = vmatprep.subr.mxu0 0.0
  %1746 = vmatpush1.msra.mxu0 %v1526
  %1747 = vmatprep.subr.mxu0 0.0
  %1748 = vmatpush1.msra.mxu0 %v1527
  %1749 = vmatprep.subr.mxu0 0.0
  %1750 = vmatpush1.msra.mxu0 %v1528
  %1751 = vmatprep.subr.mxu0 0.0
  %1752 = vmatpush1.msra.mxu0 %v1529
  %1753 = vmatprep.subr.mxu0 0.0
  %1754 = vmatpush1.msra.mxu0 %v1530
  %1755 = vmatprep.subr.mxu0 0.0
  %1756 = vmatpush1.msra.mxu0 %v1531
  %1757 = vmatprep.subr.mxu0 0.0
  %1758 = vmatpush1.msra.mxu0 %v1532
  %1759 = vmatprep.subr.mxu0 0.0
  %1760 = vmatpush1.msra.mxu0 %v1533
  %1761 = vmatprep.subr.mxu0 0.0
  %1762 = vmatpush1.msra.mxu0 %v1534
  %1763 = vmatprep.subr.mxu0 0.0
  %1764 = vmatpush1.msra.mxu0 %v1535
  %1765 = vmatprep.subr.mxu0 0.0
  %1766 = vmatpush1.msra.mxu0 %v1536
  %1767 = vmatprep.subr.mxu0 0.0
  %1768 = vmatpush1.msra.mxu0 %v1537
  %1769 = vmatprep.subr.mxu0 0.0
  %1770 = vmatpush1.msra.mxu0 %v1538
  %1771 = vmatprep.subr.mxu0 0.0
  %1772 = vmatpush1.msra.mxu0 %v1539
  %1773 = vmatprep.subr.mxu0 0.0
  %1774 = vmatpush1.msra.mxu0 %v1540
  %1775 = vmatprep.subr.mxu0 0.0
  %1776 = vmatpush1.msra.mxu0 %v1541
  %1777 = vmatprep.subr.mxu0 0.0
  %1778 = vmatpush1.msra.mxu0 %v1542
  %1779 = vmatprep.subr.mxu0 0.0
  %1780 = vmatpush1.msra.mxu0 %v1543
  %1781 = vmatprep.subr.mxu0 0.0
  %1782 = vmatpush1.msra.mxu0 %v1544
  %1783 = vmatprep.subr.mxu0 0.0
  %1784 = vmatpush1.msra.mxu0 %v1545
  %1785 = vmatprep.subr.mxu0 0.0
  %1786 = vmatpush1.msra.mxu0 %v1546
  %1787 = vmatprep.subr.mxu0 0.0
  %1788 = vmatpush1.msra.mxu0 %v1547
  %1789 = vmatprep.subr.mxu0 0.0
  %1790 = vmatpush1.msra.mxu0 %v1548
  %1791 = vmatprep.subr.mxu0 0.0
  %1792 = vmatpush1.msra.mxu0 %v1549
  %1793 = vmatprep.mubr.f32.mxu0 %v1451
  %1794 = vmatmul.mubr.f32.gmra.mrb[0].mxu0 %v1450
  %v1795 = vpop.f32.mrb[0].mxu0
  %v1796 = vadd.f32 %v1726, %v1795
  %v1797 = vpop.f32.mrb[0].mxu0
  %1798 = vdwg.mxu0
  %1799 = vmatprep.subr.mxu0 0.0
  %1800 = vmatpush1.msra.mxu0 %v1550
  %1801 = vmatprep.subr.mxu0 0.0
  %1802 = vmatpush1.msra.mxu0 %v1551
  %1803 = vmatprep.subr.mxu0 0.0
  %1804 = vmatpush1.msra.mxu0 %v1552
  %1805 = vmatprep.subr.mxu0 0.0
  %1806 = vmatpush1.msra.mxu0 %v1553
  %1807 = vmatprep.subr.mxu0 0.0
  %1808 = vmatpush1.msra.mxu0 %v1554
  %1809 = vmatprep.subr.mxu0 0.0
  %1810 = vmatpush1.msra.mxu0 %v1555
  %1811 = vmatprep.subr.mxu0 0.0
  %1812 = vmatpush1.msra.mxu0 %v1556
  %1813 = vmatprep.subr.mxu0 0.0
  %1814 = vmatpush1.msra.mxu0 %v1557
  %1815 = vmatprep.subr.mxu0 0.0
  %1816 = vmatpush1.msra.mxu0 %v1558
  %1817 = vmatprep.subr.mxu0 0.0
  %1818 = vmatpush1.msra.mxu0 %v1559
  %1819 = vmatprep.subr.mxu0 0.0
  %1820 = vmatpush1.msra.mxu0 %v1560
  %1821 = vmatprep.subr.mxu0 0.0
  %1822 = vmatpush1.msra.mxu0 %v1561
  %1823 = vmatprep.subr.mxu0 0.0
  %1824 = vmatpush1.msra.mxu0 %v1562
  %1825 = vmatprep.subr.mxu0 0.0
  %1826 = vmatpush1.msra.mxu0 %v1563
  %1827 = vmatprep.subr.mxu0 0.0
  %1828 = vmatpush1.msra.mxu0 %v1564
  %1829 = vmatprep.subr.mxu0 0.0
  %1830 = vmatpush1.msra.mxu0 %v1565
  %1831 = vmatprep.subr.mxu0 0.0
  %1832 = vmatpush1.msra.mxu0 %v1566
  %1833 = vmatprep.subr.mxu0 0.0
  %1834 = vmatpush1.msra.mxu0 %v1567
  %1835 = vmatprep.subr.mxu0 0.0
  %1836 = vmatpush1.msra.mxu0 %v1568
  %1837 = vmatprep.subr.mxu0 0.0
  %1838 = vmatpush1.msra.mxu0 %v1569
  %1839 = vmatprep.subr.mxu0 0.0
  %1840 = vmatpush1.msra.mxu0 %v1570
  %1841 = vmatprep.subr.mxu0 0.0
  %1842 = vmatpush1.msra.mxu0 %v1571
  %1843 = vmatprep.subr.mxu0 0.0
  %1844 = vmatpush1.msra.mxu0 %v1572
  %1845 = vmatprep.subr.mxu0 0.0
  %1846 = vmatpush1.msra.mxu0 %v1573
  %1847 = vmatprep.subr.mxu0 0.0
  %1848 = vmatpush1.msra.mxu0 %v1574
  %1849 = vmatprep.subr.mxu0 0.0
  %1850 = vmatpush1.msra.mxu0 %v1575
  %1851 = vmatprep.subr.mxu0 0.0
  %1852 = vmatpush1.msra.mxu0 %v1576
  %1853 = vmatprep.subr.mxu0 0.0
  %1854 = vmatpush1.msra.mxu0 %v1577
  %1855 = vmatprep.subr.mxu0 0.0
  %1856 = vmatpush1.msra.mxu0 %v1578
  %1857 = vmatprep.subr.mxu0 0.0
  %1858 = vmatpush1.msra.mxu0 %v1579
  %1859 = vmatprep.subr.mxu0 0.0
  %1860 = vmatpush1.msra.mxu0 %v1580
  %1861 = vmatprep.subr.mxu0 0.0
  %1862 = vmatpush1.msra.mxu0 %v1581
  %1863 = vmatprep.mubr.f32.mxu0 %v1453
  %1864 = vmatmul.mubr.f32.gmra.mrb[0].mxu0 %v1452
  %v1865 = vpop.f32.mrb[0].mxu0
  %v1866 = vadd.f32 %v1796, %v1865
  %v1867 = vpop.f32.mrb[0].mxu0
  %1868 = vdwg.mxu0
  %1869 = vst [vmem:[%s7] sm:$0xff] %v1866
  // Predicated region
  $region30: #{dqn_forward.1} parent=0 // pred_check
    _
  $region31: #{dqn_forward.1} parent=0 // pred_check_branch
    %1871 = sbr.rel (0) target = $region33
  $region32: #{dqn_forward.1} parent=0 // pred_region
    _
  $region33: #{dqn_forward.1} parent=0 // pred_fallthru
    _
  // Predicated region
  $region34: #{dqn_forward.1} parent=0 // pred_check
    _
  $region35: #{dqn_forward.1} parent=0 // pred_check_branch
    %1873 = sbr.rel (0) target = $region37
  $region36: #{dqn_forward.1} parent=0 // pred_region
    _
  $region37: #{dqn_forward.1} parent=0 // pred_fallthru
    _

</llo_original>
